<compile_context>
chip_gen: v6e
topology: v6e:2x2x1
jax: 0.10.0
libtpu: 0.0.40
codegen_flags: <defaults>
</compile_context>

<pallas_src>
import jax
import jax.numpy as jnp
from jax.experimental import pallas as pl
from jax.experimental.pallas import tpu as pltpu

BN_EPS = 1e-5
PAD = 128  # lane-dense feature width; every packed layer dim in this model is <= 128


# ----------------------------------------------------------------------------
# Shared math: one-pass BatchNorm (training-mode batch stats, gamma=1/beta=0) + ReLU.
# Works both inside the Pallas kernel and in the pure-JAX references.
# ----------------------------------------------------------------------------
def _bn_relu(y):
    inv_b = 1.0 / y.shape[0]
    mean = jnp.sum(y, axis=0, keepdims=True) * inv_b
    msq = jnp.sum(y * y, axis=0, keepdims=True) * inv_b
    var = jnp.maximum(msq - mean * mean, 0.0)          # guard tiny cancellation
    return jnp.maximum((y - mean) * jax.lax.rsqrt(var + BN_EPS), 0.0)


# ----------------------------------------------------------------------------
# Static per-layer schedule shared by the kernel and the packed reference.
# Each entry: (bias_index or None, apply_bn_relu).
# ----------------------------------------------------------------------------
def build_plan(separated_layer, shared_layer):
    n_enc = len(separated_layer)
    n_shared = len(shared_layer)
    n_rev = n_shared + 1
    n_dec = n_enc + 1
    plan = []
    plan += [(None, True)] * n_enc          # packed (block-diag) encoders
    plan += [(None, True)] * n_shared       # shared MLP
    plan += [(None, True)] * (n_rev - 1)    # reverse shared MLP (hidden layers)
    plan += [(0, False)]                    # reverse shared final: bias, no BN/ReLU
    plan += [(None, True)] * (n_dec - 1)    # packed decoders (hidden layers)
    plan += [(1, False)]                    # packed decoder final: denorm bias, no BN
    return plan


# ----------------------------------------------------------------------------
# Fused Pallas kernel: the whole autoencoder forward on one (B, 128) slab.
# ----------------------------------------------------------------------------
def _make_kernel(plan):
    def kernel(x_ref, w_ref, b_ref, o_ref):
        h = x_ref[...]                                   # (B, 128) f32
        for i, (bias_idx, do_bn) in enumerate(plan):
            # bf16 x bf16 MXU matmul, f32 accumulation.
            y = jnp.dot(h.astype(jnp.bfloat16), w_ref[i],
                        preferred_element_type=jnp.float32)
            if bias_idx is not None:
                y = y + b_ref[bias_idx]
            if do_bn:
                y = _bn_relu(y)
            h = y
        o_ref[...] = h
    return kernel


# ----------------------------------------------------------------------------
# Input packing: one lane-banded (B, 128) slab via a single concatenate.
# ----------------------------------------------------------------------------
def pack_inputs(x_dict, input_dims, band, pad=PAD):
    names = list(input_dims.keys())
    batch = x_dict[names[0]].shape[0]
    parts = []
    for name in names:
        parts.append(x_dict[name].astype(jnp.float32))
        gap = band - input_dims[name]
        if gap:
            parts.append(jnp.zeros((batch, gap), jnp.float32))
    tail = pad - len(names) * band
    if tail:
        parts.append(jnp.zeros((batch, tail), jnp.float32))
    return jnp.concatenate(parts, axis=1)


def make_forward(input_dims, separated_layer, shared_layer, pad=PAD):
    names = list(input_dims.keys())
    n_mod = len(names)
    band = pad // n_mod
    plan = build_plan(separated_layer, shared_layer)
    n_layers = len(plan)
    n_bn = sum(1 for _, bn in plan if bn)
    kernel = _make_kernel(plan)

    @jax.jit
    def forward(w_stack, b_stack, x_dict):
        assert w_stack.shape == (n_layers, pad, pad) and w_stack.dtype == jnp.bfloat16
        assert b_stack.shape == (2, 1, pad)
        batch = x_dict[names[0]].shape[0]
        x_slab = pack_inputs(x_dict, input_dims, band, pad)

        cost = pl.CostEstimate(
            flops=2 * n_layers * batch * pad * pad,
            transcendentals=n_bn * pad,                       # one rsqrt per BN lane
            bytes_accessed=(n_layers * pad * pad * 2          # bf16 weights
                            + 2 * pad * 4                     # biases
                            + 2 * batch * pad * 4),           # x slab + out slab
        )
        out = pl.pallas_call(
            kernel,
            out_shape=jax.ShapeDtypeStruct((batch, pad), jnp.float32),
            in_specs=[pl.BlockSpec(memory_space=pltpu.MemorySpace.VMEM)] * 3,
            out_specs=pl.BlockSpec(memory_space=pltpu.MemorySpace.VMEM),
            cost_estimate=cost,
        )(x_slab, w_stack, b_stack)
        return {name: out[:, m * band: m * band + input_dims[name]]
                for m, name in enumerate(names)}

    return forward


# ----------------------------------------------------------------------------
# Deterministic parameter init (PyTorch-Linear-style uniform(-1/sqrt(fan_in), ..))
# ----------------------------------------------------------------------------
def _init_linear(key, din, dout):
    kw, kb = jax.random.split(key)
    bound = 1.0 / (din ** 0.5)
    w = jax.random.uniform(kw, (din, dout), jnp.float32, -bound, bound)
    b = jax.random.uniform(kb, (dout,), jnp.float32, -bound, bound)
    return w, b


def _init_mlp(key, dims):
    layers = []
    for i in range(len(dims) - 1):
        key, sub = jax.random.split(key)
        layers.append(_init_linear(sub, dims[i], dims[i + 1]))
    return layers, key


def init_params(key, input_dims, separated_layer, shared_layer):
    names = list(input_dims.keys())
    params = {"enc": {}, "dec": {}}
    for name in names:                              # per-modality encoders
        params["enc"][name], key = _init_mlp(key, [input_dims[name]] + separated_layer)
    params["shared"], key = _init_mlp(              # shared layer
        key, [len(names) * separated_layer[-1]] + shared_layer)
    params["rev_shared"], key = _init_mlp(          # reverse shared layer
        key, [shared_layer[-1]] + shared_layer[::-1] + [len(names) * separated_layer[-1]])
    for name in names:                              # per-modality decoders
        params["dec"][name], key = _init_mlp(
            key, [separated_layer[-1]] + separated_layer[::-1] + [input_dims[name]])
    return params


# ----------------------------------------------------------------------------
# Pack parameters: lane-banded block-diagonal bf16 (128,128) slabs.
# Min-max norm scale folded into encoder layer 0; denorm folded into decoder last
# layer; cat/split folded into row/column band placement; biases of BN-followed
# layers dropped (exact no-op under training-mode BN with beta=0).
# ----------------------------------------------------------------------------
def pack_params(params, input_dims, separated_layer, shared_layer,
                normalization_values, pad=PAD):
    names = list(input_dims.keys())
    n_mod = len(names)
    band = pad // n_mod
    chunk = separated_layer[-1]
    assert max(list(input_dims.values()) + separated_layer) <= band, \
        "per-modality layer widths must fit in one lane band"
    assert max(shared_layer) <= pad and n_mod * chunk <= pad

    Ws = []

    def blank():
        return jnp.zeros((pad, pad), jnp.float32)

    # --- encoders: block-diagonal across modalities; norm scale folded into layer 0 ---
    n_enc = len(separated_layer)
    for j in range(n_enc):
        W = blank()
        for m, name in enumerate(names):
            w, _b = params["enc"][name][j]
            if j == 0:
                mn = float(normalization_values[name]["min"])
                mx = float(normalization_values[name]["max"])
                assert mx != mn, f"degenerate normalization range for '{name}'"
                w = w * (1.0 / (mx - mn))
            din, dout = w.shape
            W = W.at[m * band:m * band + din, m * band:m * band + dout].set(w)
        Ws.append(W)

    # --- shared layer 0: the torch.cat is already materialized in lane bands ---
    w0, _b0 = params["shared"][0]
    W = blank()
    for m in range(n_mod):
        W = W.at[m * band:m * band + chunk, :w0.shape[1]].set(
            w0[m * chunk:(m + 1) * chunk, :])
    Ws.append(W)
    for (w, _b) in params["shared"][1:]:
        Ws.append(blank().at[:w.shape[0], :w.shape[1]].set(w))

    # --- reverse shared layers; final layer keeps its bias and scatters its output
    #     columns into per-modality lane bands (torch.split for free) ---
    rev = params["rev_shared"]
    for (w, _b) in rev[:-1]:
        Ws.append(blank().at[:w.shape[0], :w.shape[1]].set(w))
    w_last, b_last = rev[-1]
    W = blank()
    b0 = jnp.zeros((1, pad), jnp.float32)
    for m in range(n_mod):
        W = W.at[:w_last.shape[0], m * band:m * band + chunk].set(
            w_last[:, m * chunk:(m + 1) * chunk])
        b0 = b0.at[0, m * band:m * band + chunk].set(
            b_last[m * chunk:(m + 1) * chunk])
    Ws.append(W)

    # --- decoders: block-diagonal; min-max denormalization folded into last layer ---
    n_dec = len(separated_layer) + 1
    b1 = jnp.zeros((1, pad), jnp.float32)
    for j in range(n_dec):
        W = blank()
        for m, name in enumerate(names):
            w, b = params["dec"][name][j]
            din, dout = w.shape
            if j == n_dec - 1:
                mn = float(normalization_values[name]["min"])
                mx = float(normalization_values[name]["max"])
                w = w * (mx - mn)
                b1 = b1.at[0, m * band:m * band + dout].set(b * (mx - mn) + mn)
            W = W.at[m * band:m * band + din, m * band:m * band + dout].set(w)
        Ws.append(W)

    w_stack = jnp.stack(Ws).astype(jnp.bfloat16)     # (L, 128, 128) bf16
    b_stack = jnp.stack([b0, b1])                    # (2, 1, 128) f32
    return w_stack, b_stack


# ----------------------------------------------------------------------------
# Pure-JAX replay of the packed bf16 computation (verifies the kernel faithfully
# executes the packed algorithm: layout, layer order, BN, biases).
# ----------------------------------------------------------------------------
def packed_reference(plan, w_stack, b_stack, x_slab):
    HI = jax.lax.Precision.HIGHEST
    h = x_slab
    for i, (bias_idx, do_bn) in enumerate(plan):
        hb = h.astype(jnp.bfloat16).astype(jnp.float32)
        wf = w_stack[i].astype(jnp.float32)
        y = jnp.dot(hb, wf, precision=HI)
        if bias_idx is not None:
            y = y + b_stack[bias_idx]
        if do_bn:
            y = _bn_relu(y)
        h = y
    return h


# ----------------------------------------------------------------------------
# Pure-JAX full-precision reference of the PyTorch forward (semantic check).
# ----------------------------------------------------------------------------
def reference_forward(params, x_dict, *, input_dims, separated_layer, shared_layer,
                      normalization_values):
    names = list(input_dims.keys())
    HI = jax.lax.Precision.HIGHEST

    encoded = []
    for name in names:
        mn = float(normalization_values[name]["min"])
        mx = float(normalization_values[name]["max"])
        h = (x_dict[name] - mn) / (mx - mn)
        for (w, b) in params["enc"][name]:
            h = _bn_relu(jnp.dot(h, w, precision=HI) + b)
        encoded.append(h)
    h = jnp.concatenate(encoded, axis=1)
    for (w, b) in params["shared"]:
        h = _bn_relu(jnp.dot(h, w, precision=HI) + b)

    rev = params["rev_shared"]
    for j, (w, b) in enumerate(rev):
        h = jnp.dot(h, w, precision=HI) + b
        if j < len(rev) - 1:
            h = _bn_relu(h)

    chunk = separated_layer[-1]
    outs = {}
    for i, name in enumerate(names):
        mn = float(normalization_values[name]["min"])
        mx = float(normalization_values[name]["max"])
        t = h[:, i * chunk:(i + 1) * chunk]
        dec = params["dec"][name]
        for j, (w, b) in enumerate(dec):
            t = jnp.dot(t, w, precision=HI) + b
            if j < len(dec) - 1:
                t = _bn_relu(t)
        outs[name] = t * (mx - mn) + mn
    return outs


# ----------------------------------------------------------------------------
if __name__ == "__main__":
    input_dims = {"mod_a": 6, "mod_b": 10}
    separated_layer = [32, 16]
    shared_layer = [16, 8]
    normalization_values = {
        "mod_a": {"max": 5.0, "min": -5.0},
        "mod_b": {"max": 10.0, "min": 0.0},
    }
    batch = 8
    band = PAD // len(input_dims)

    key = jax.random.PRNGKey(0)
    key, kp, ka, kb = jax.random.split(key, 4)
    params = init_params(kp, input_dims, separated_layer, shared_layer)
    w_stack, b_stack = pack_params(params, input_dims, separated_layer,
                                   shared_layer, normalization_values)

    x = {
        "mod_a": jax.random.uniform(ka, (batch, input_dims["mod_a"]),
                                    jnp.float32, -5.0, 5.0),
        "mod_b": jax.random.uniform(kb, (batch, input_dims["mod_b"]),
                                    jnp.float32, 0.0, 10.0),
    }

    fwd = make_forward(input_dims, separated_layer, shared_layer)
    out = fwd(w_stack, b_stack, x)
    for name in input_dims:
        jax.block_until_ready(out[name])
        assert out[name].shape == (batch, input_dims[name])
        assert out[name].dtype == jnp.float32
        assert bool(jnp.all(jnp.isfinite(out[name])))

    # Check 1 (tight): kernel vs pure-JAX replay of the SAME packed bf16 computation.
    plan = build_plan(separated_layer, shared_layer)
    x_slab = pack_inputs(x, input_dims, band)
    ref_slab = packed_reference(plan, w_stack, b_stack, x_slab)
    for m, name in enumerate(input_dims):
        rp = ref_slab[:, m * band: m * band + input_dims[name]]
        err = float(jnp.max(jnp.abs(out[name] - rp)))
        tol = 1e-3 * (1.0 + float(jnp.max(jnp.abs(rp))))
        assert err < tol, f"{name}: |pallas - packed_ref| = {err} (tol {tol})"

    # Check 2 (semantic): kernel vs full-f32 reference of the PyTorch module.
    # Looser bound because MXU operands are bf16 (per performance review); a
    # structural bug would give O(1) relative error here.
    ref = reference_forward(params, x, input_dims=input_dims,
                            separated_layer=separated_layer,
                            shared_layer=shared_layer,
                            normalization_values=normalization_values)
    for name in input_dims:
        num = float(jnp.linalg.norm(out[name] - ref[name]))
        den = float(jnp.linalg.norm(ref[name])) + 1e-6
        assert num / den < 0.1, f"{name}: relative L2 error = {num / den}"

    print("KERNEL_OK")
</pallas_src>

<mosaic_0001>
module attributes {stable_mosaic.version = 11 : i64} {
  func.func @kernel(%arg0: memref<8x128xf32, #tpu.memory_space<vmem>>, %arg1: memref<10x128x128xbf16, #tpu.memory_space<vmem>>, %arg2: memref<2x1x128xf32, #tpu.memory_space<vmem>>, %arg3: memref<8x128xf32, #tpu.memory_space<vmem>>) attributes {dimension_semantics = [], scalar_prefetch = 0 : i64, scratch_operands = 0 : i64, tpu.core_type = #tpu.core_type<tc>} {
    %c0 = arith.constant 0 : index
    %c0_0 = arith.constant 0 : index
    %0 = vector.load %arg0[%c0, %c0_0] : memref<8x128xf32, #tpu.memory_space<vmem>>, vector<8x128xf32>
    %1 = arith.truncf %0 : vector<8x128xf32> to vector<8x128xbf16>
    %c0_1 = arith.constant 0 : index
    %c0_2 = arith.constant 0 : index
    %c0_3 = arith.constant 0 : index
    %2 = vector.load %arg1[%c0_1, %c0_2, %c0_3] : memref<10x128x128xbf16, #tpu.memory_space<vmem>>, vector<1x128x128xbf16>
    %3 = vector.shape_cast %2 : vector<1x128x128xbf16> to vector<128x128xbf16>
    %cst = arith.constant dense<0.000000e+00> : vector<8x128xf32>
    %4 = tpu.matmul %1, %3, %cst {dimension_numbers = #tpu.dot_dimension_numbers<[1], [0], [0], [1], [0, 0, 1, 1], [], []>} : vector<8x128xbf16>, vector<128x128xbf16>, vector<8x128xf32> -> vector<8x128xf32>
    %cst_4 = arith.constant dense<0.000000e+00> : vector<128xf32>
    %5 = vector.multi_reduction <add>, %4, %cst_4 [0] : vector<8x128xf32> to vector<128xf32>
    %6 = vector.shape_cast %5 : vector<128xf32> to vector<1x128xf32>
    %cst_5 = arith.constant 1.250000e-01 : f32
    %7 = vector.broadcast %cst_5 : f32 to vector<1x128xf32>
    %8 = arith.mulf %6, %7 : vector<1x128xf32>
    %9 = arith.mulf %4, %4 : vector<8x128xf32>
    %cst_6 = arith.constant dense<0.000000e+00> : vector<128xf32>
    %10 = vector.multi_reduction <add>, %9, %cst_6 [0] : vector<8x128xf32> to vector<128xf32>
    %11 = vector.shape_cast %10 : vector<128xf32> to vector<1x128xf32>
    %cst_7 = arith.constant 1.250000e-01 : f32
    %12 = vector.broadcast %cst_7 : f32 to vector<1x128xf32>
    %13 = arith.mulf %11, %12 : vector<1x128xf32>
    %14 = arith.mulf %8, %8 : vector<1x128xf32>
    %15 = arith.subf %13, %14 : vector<1x128xf32>
    %cst_8 = arith.constant 0.000000e+00 : f32
    %16 = vector.broadcast %cst_8 : f32 to vector<1x128xf32>
    %17 = arith.maximumf %15, %16 : vector<1x128xf32>
    %18 = vector.broadcast %8 : vector<1x128xf32> to vector<8x128xf32>
    %19 = arith.subf %4, %18 : vector<8x128xf32>
    %cst_9 = arith.constant 9.99999974E-6 : f32
    %20 = vector.broadcast %cst_9 : f32 to vector<1x128xf32>
    %21 = arith.addf %17, %20 : vector<1x128xf32>
    %22 = math.rsqrt %21 : vector<1x128xf32>
    %23 = vector.broadcast %22 : vector<1x128xf32> to vector<8x128xf32>
    %24 = arith.mulf %19, %23 : vector<8x128xf32>
    %cst_10 = arith.constant 0.000000e+00 : f32
    %25 = vector.broadcast %cst_10 : f32 to vector<8x128xf32>
    %26 = arith.maximumf %24, %25 : vector<8x128xf32>
    %27 = arith.truncf %26 : vector<8x128xf32> to vector<8x128xbf16>
    %c1 = arith.constant 1 : index
    %c0_11 = arith.constant 0 : index
    %c0_12 = arith.constant 0 : index
    %28 = vector.load %arg1[%c1, %c0_11, %c0_12] : memref<10x128x128xbf16, #tpu.memory_space<vmem>>, vector<1x128x128xbf16>
    %29 = vector.shape_cast %28 : vector<1x128x128xbf16> to vector<128x128xbf16>
    %cst_13 = arith.constant dense<0.000000e+00> : vector<8x128xf32>
    %30 = tpu.matmul %27, %29, %cst_13 {dimension_numbers = #tpu.dot_dimension_numbers<[1], [0], [0], [1], [0, 0, 1, 1], [], []>} : vector<8x128xbf16>, vector<128x128xbf16>, vector<8x128xf32> -> vector<8x128xf32>
    %cst_14 = arith.constant dense<0.000000e+00> : vector<128xf32>
    %31 = vector.multi_reduction <add>, %30, %cst_14 [0] : vector<8x128xf32> to vector<128xf32>
    %32 = vector.shape_cast %31 : vector<128xf32> to vector<1x128xf32>
    %cst_15 = arith.constant 1.250000e-01 : f32
    %33 = vector.broadcast %cst_15 : f32 to vector<1x128xf32>
    %34 = arith.mulf %32, %33 : vector<1x128xf32>
    %35 = arith.mulf %30, %30 : vector<8x128xf32>
    %cst_16 = arith.constant dense<0.000000e+00> : vector<128xf32>
    %36 = vector.multi_reduction <add>, %35, %cst_16 [0] : vector<8x128xf32> to vector<128xf32>
    %37 = vector.shape_cast %36 : vector<128xf32> to vector<1x128xf32>
    %cst_17 = arith.constant 1.250000e-01 : f32
    %38 = vector.broadcast %cst_17 : f32 to vector<1x128xf32>
    %39 = arith.mulf %37, %38 : vector<1x128xf32>
    %40 = arith.mulf %34, %34 : vector<1x128xf32>
    %41 = arith.subf %39, %40 : vector<1x128xf32>
    %cst_18 = arith.constant 0.000000e+00 : f32
    %42 = vector.broadcast %cst_18 : f32 to vector<1x128xf32>
    %43 = arith.maximumf %41, %42 : vector<1x128xf32>
    %44 = vector.broadcast %34 : vector<1x128xf32> to vector<8x128xf32>
    %45 = arith.subf %30, %44 : vector<8x128xf32>
    %cst_19 = arith.constant 9.99999974E-6 : f32
    %46 = vector.broadcast %cst_19 : f32 to vector<1x128xf32>
    %47 = arith.addf %43, %46 : vector<1x128xf32>
    %48 = math.rsqrt %47 : vector<1x128xf32>
    %49 = vector.broadcast %48 : vector<1x128xf32> to vector<8x128xf32>
    %50 = arith.mulf %45, %49 : vector<8x128xf32>
    %cst_20 = arith.constant 0.000000e+00 : f32
    %51 = vector.broadcast %cst_20 : f32 to vector<8x128xf32>
    %52 = arith.maximumf %50, %51 : vector<8x128xf32>
    %53 = arith.truncf %52 : vector<8x128xf32> to vector<8x128xbf16>
    %c2 = arith.constant 2 : index
    %c0_21 = arith.constant 0 : index
    %c0_22 = arith.constant 0 : index
    %54 = vector.load %arg1[%c2, %c0_21, %c0_22] : memref<10x128x128xbf16, #tpu.memory_space<vmem>>, vector<1x128x128xbf16>
    %55 = vector.shape_cast %54 : vector<1x128x128xbf16> to vector<128x128xbf16>
    %cst_23 = arith.constant dense<0.000000e+00> : vector<8x128xf32>
    %56 = tpu.matmul %53, %55, %cst_23 {dimension_numbers = #tpu.dot_dimension_numbers<[1], [0], [0], [1], [0, 0, 1, 1], [], []>} : vector<8x128xbf16>, vector<128x128xbf16>, vector<8x128xf32> -> vector<8x128xf32>
    %cst_24 = arith.constant dense<0.000000e+00> : vector<128xf32>
    %57 = vector.multi_reduction <add>, %56, %cst_24 [0] : vector<8x128xf32> to vector<128xf32>
    %58 = vector.shape_cast %57 : vector<128xf32> to vector<1x128xf32>
    %cst_25 = arith.constant 1.250000e-01 : f32
    %59 = vector.broadcast %cst_25 : f32 to vector<1x128xf32>
    %60 = arith.mulf %58, %59 : vector<1x128xf32>
    %61 = arith.mulf %56, %56 : vector<8x128xf32>
    %cst_26 = arith.constant dense<0.000000e+00> : vector<128xf32>
    %62 = vector.multi_reduction <add>, %61, %cst_26 [0] : vector<8x128xf32> to vector<128xf32>
    %63 = vector.shape_cast %62 : vector<128xf32> to vector<1x128xf32>
    %cst_27 = arith.constant 1.250000e-01 : f32
    %64 = vector.broadcast %cst_27 : f32 to vector<1x128xf32>
    %65 = arith.mulf %63, %64 : vector<1x128xf32>
    %66 = arith.mulf %60, %60 : vector<1x128xf32>
    %67 = arith.subf %65, %66 : vector<1x128xf32>
    %cst_28 = arith.constant 0.000000e+00 : f32
    %68 = vector.broadcast %cst_28 : f32 to vector<1x128xf32>
    %69 = arith.maximumf %67, %68 : vector<1x128xf32>
    %70 = vector.broadcast %60 : vector<1x128xf32> to vector<8x128xf32>
    %71 = arith.subf %56, %70 : vector<8x128xf32>
    %cst_29 = arith.constant 9.99999974E-6 : f32
    %72 = vector.broadcast %cst_29 : f32 to vector<1x128xf32>
    %73 = arith.addf %69, %72 : vector<1x128xf32>
    %74 = math.rsqrt %73 : vector<1x128xf32>
    %75 = vector.broadcast %74 : vector<1x128xf32> to vector<8x128xf32>
    %76 = arith.mulf %71, %75 : vector<8x128xf32>
    %cst_30 = arith.constant 0.000000e+00 : f32
    %77 = vector.broadcast %cst_30 : f32 to vector<8x128xf32>
    %78 = arith.maximumf %76, %77 : vector<8x128xf32>
    %79 = arith.truncf %78 : vector<8x128xf32> to vector<8x128xbf16>
    %c3 = arith.constant 3 : index
    %c0_31 = arith.constant 0 : index
    %c0_32 = arith.constant 0 : index
    %80 = vector.load %arg1[%c3, %c0_31, %c0_32] : memref<10x128x128xbf16, #tpu.memory_space<vmem>>, vector<1x128x128xbf16>
    %81 = vector.shape_cast %80 : vector<1x128x128xbf16> to vector<128x128xbf16>
    %cst_33 = arith.constant dense<0.000000e+00> : vector<8x128xf32>
    %82 = tpu.matmul %79, %81, %cst_33 {dimension_numbers = #tpu.dot_dimension_numbers<[1], [0], [0], [1], [0, 0, 1, 1], [], []>} : vector<8x128xbf16>, vector<128x128xbf16>, vector<8x128xf32> -> vector<8x128xf32>
    %cst_34 = arith.constant dense<0.000000e+00> : vector<128xf32>
    %83 = vector.multi_reduction <add>, %82, %cst_34 [0] : vector<8x128xf32> to vector<128xf32>
    %84 = vector.shape_cast %83 : vector<128xf32> to vector<1x128xf32>
    %cst_35 = arith.constant 1.250000e-01 : f32
    %85 = vector.broadcast %cst_35 : f32 to vector<1x128xf32>
    %86 = arith.mulf %84, %85 : vector<1x128xf32>
    %87 = arith.mulf %82, %82 : vector<8x128xf32>
    %cst_36 = arith.constant dense<0.000000e+00> : vector<128xf32>
    %88 = vector.multi_reduction <add>, %87, %cst_36 [0] : vector<8x128xf32> to vector<128xf32>
    %89 = vector.shape_cast %88 : vector<128xf32> to vector<1x128xf32>
    %cst_37 = arith.constant 1.250000e-01 : f32
    %90 = vector.broadcast %cst_37 : f32 to vector<1x128xf32>
    %91 = arith.mulf %89, %90 : vector<1x128xf32>
    %92 = arith.mulf %86, %86 : vector<1x128xf32>
    %93 = arith.subf %91, %92 : vector<1x128xf32>
    %cst_38 = arith.constant 0.000000e+00 : f32
    %94 = vector.broadcast %cst_38 : f32 to vector<1x128xf32>
    %95 = arith.maximumf %93, %94 : vector<1x128xf32>
    %96 = vector.broadcast %86 : vector<1x128xf32> to vector<8x128xf32>
    %97 = arith.subf %82, %96 : vector<8x128xf32>
    %cst_39 = arith.constant 9.99999974E-6 : f32
    %98 = vector.broadcast %cst_39 : f32 to vector<1x128xf32>
    %99 = arith.addf %95, %98 : vector<1x128xf32>
    %100 = math.rsqrt %99 : vector<1x128xf32>
    %101 = vector.broadcast %100 : vector<1x128xf32> to vector<8x128xf32>
    %102 = arith.mulf %97, %101 : vector<8x128xf32>
    %cst_40 = arith.constant 0.000000e+00 : f32
    %103 = vector.broadcast %cst_40 : f32 to vector<8x128xf32>
    %104 = arith.maximumf %102, %103 : vector<8x128xf32>
    %105 = arith.truncf %104 : vector<8x128xf32> to vector<8x128xbf16>
    %c4 = arith.constant 4 : index
    %c0_41 = arith.constant 0 : index
    %c0_42 = arith.constant 0 : index
    %106 = vector.load %arg1[%c4, %c0_41, %c0_42] : memref<10x128x128xbf16, #tpu.memory_space<vmem>>, vector<1x128x128xbf16>
    %107 = vector.shape_cast %106 : vector<1x128x128xbf16> to vector<128x128xbf16>
    %cst_43 = arith.constant dense<0.000000e+00> : vector<8x128xf32>
    %108 = tpu.matmul %105, %107, %cst_43 {dimension_numbers = #tpu.dot_dimension_numbers<[1], [0], [0], [1], [0, 0, 1, 1], [], []>} : vector<8x128xbf16>, vector<128x128xbf16>, vector<8x128xf32> -> vector<8x128xf32>
    %cst_44 = arith.constant dense<0.000000e+00> : vector<128xf32>
    %109 = vector.multi_reduction <add>, %108, %cst_44 [0] : vector<8x128xf32> to vector<128xf32>
    %110 = vector.shape_cast %109 : vector<128xf32> to vector<1x128xf32>
    %cst_45 = arith.constant 1.250000e-01 : f32
    %111 = vector.broadcast %cst_45 : f32 to vector<1x128xf32>
    %112 = arith.mulf %110, %111 : vector<1x128xf32>
    %113 = arith.mulf %108, %108 : vector<8x128xf32>
    %cst_46 = arith.constant dense<0.000000e+00> : vector<128xf32>
    %114 = vector.multi_reduction <add>, %113, %cst_46 [0] : vector<8x128xf32> to vector<128xf32>
    %115 = vector.shape_cast %114 : vector<128xf32> to vector<1x128xf32>
    %cst_47 = arith.constant 1.250000e-01 : f32
    %116 = vector.broadcast %cst_47 : f32 to vector<1x128xf32>
    %117 = arith.mulf %115, %116 : vector<1x128xf32>
    %118 = arith.mulf %112, %112 : vector<1x128xf32>
    %119 = arith.subf %117, %118 : vector<1x128xf32>
    %cst_48 = arith.constant 0.000000e+00 : f32
    %120 = vector.broadcast %cst_48 : f32 to vector<1x128xf32>
    %121 = arith.maximumf %119, %120 : vector<1x128xf32>
    %122 = vector.broadcast %112 : vector<1x128xf32> to vector<8x128xf32>
    %123 = arith.subf %108, %122 : vector<8x128xf32>
    %cst_49 = arith.constant 9.99999974E-6 : f32
    %124 = vector.broadcast %cst_49 : f32 to vector<1x128xf32>
    %125 = arith.addf %121, %124 : vector<1x128xf32>
    %126 = math.rsqrt %125 : vector<1x128xf32>
    %127 = vector.broadcast %126 : vector<1x128xf32> to vector<8x128xf32>
    %128 = arith.mulf %123, %127 : vector<8x128xf32>
    %cst_50 = arith.constant 0.000000e+00 : f32
    %129 = vector.broadcast %cst_50 : f32 to vector<8x128xf32>
    %130 = arith.maximumf %128, %129 : vector<8x128xf32>
    %131 = arith.truncf %130 : vector<8x128xf32> to vector<8x128xbf16>
    %c5 = arith.constant 5 : index
    %c0_51 = arith.constant 0 : index
    %c0_52 = arith.constant 0 : index
    %132 = vector.load %arg1[%c5, %c0_51, %c0_52] : memref<10x128x128xbf16, #tpu.memory_space<vmem>>, vector<1x128x128xbf16>
    %133 = vector.shape_cast %132 : vector<1x128x128xbf16> to vector<128x128xbf16>
    %cst_53 = arith.constant dense<0.000000e+00> : vector<8x128xf32>
    %134 = tpu.matmul %131, %133, %cst_53 {dimension_numbers = #tpu.dot_dimension_numbers<[1], [0], [0], [1], [0, 0, 1, 1], [], []>} : vector<8x128xbf16>, vector<128x128xbf16>, vector<8x128xf32> -> vector<8x128xf32>
    %cst_54 = arith.constant dense<0.000000e+00> : vector<128xf32>
    %135 = vector.multi_reduction <add>, %134, %cst_54 [0] : vector<8x128xf32> to vector<128xf32>
    %136 = vector.shape_cast %135 : vector<128xf32> to vector<1x128xf32>
    %cst_55 = arith.constant 1.250000e-01 : f32
    %137 = vector.broadcast %cst_55 : f32 to vector<1x128xf32>
    %138 = arith.mulf %136, %137 : vector<1x128xf32>
    %139 = arith.mulf %134, %134 : vector<8x128xf32>
    %cst_56 = arith.constant dense<0.000000e+00> : vector<128xf32>
    %140 = vector.multi_reduction <add>, %139, %cst_56 [0] : vector<8x128xf32> to vector<128xf32>
    %141 = vector.shape_cast %140 : vector<128xf32> to vector<1x128xf32>
    %cst_57 = arith.constant 1.250000e-01 : f32
    %142 = vector.broadcast %cst_57 : f32 to vector<1x128xf32>
    %143 = arith.mulf %141, %142 : vector<1x128xf32>
    %144 = arith.mulf %138, %138 : vector<1x128xf32>
    %145 = arith.subf %143, %144 : vector<1x128xf32>
    %cst_58 = arith.constant 0.000000e+00 : f32
    %146 = vector.broadcast %cst_58 : f32 to vector<1x128xf32>
    %147 = arith.maximumf %145, %146 : vector<1x128xf32>
    %148 = vector.broadcast %138 : vector<1x128xf32> to vector<8x128xf32>
    %149 = arith.subf %134, %148 : vector<8x128xf32>
    %cst_59 = arith.constant 9.99999974E-6 : f32
    %150 = vector.broadcast %cst_59 : f32 to vector<1x128xf32>
    %151 = arith.addf %147, %150 : vector<1x128xf32>
    %152 = math.rsqrt %151 : vector<1x128xf32>
    %153 = vector.broadcast %152 : vector<1x128xf32> to vector<8x128xf32>
    %154 = arith.mulf %149, %153 : vector<8x128xf32>
    %cst_60 = arith.constant 0.000000e+00 : f32
    %155 = vector.broadcast %cst_60 : f32 to vector<8x128xf32>
    %156 = arith.maximumf %154, %155 : vector<8x128xf32>
    %157 = arith.truncf %156 : vector<8x128xf32> to vector<8x128xbf16>
    %c6 = arith.constant 6 : index
    %c0_61 = arith.constant 0 : index
    %c0_62 = arith.constant 0 : index
    %158 = vector.load %arg1[%c6, %c0_61, %c0_62] : memref<10x128x128xbf16, #tpu.memory_space<vmem>>, vector<1x128x128xbf16>
    %159 = vector.shape_cast %158 : vector<1x128x128xbf16> to vector<128x128xbf16>
    %cst_63 = arith.constant dense<0.000000e+00> : vector<8x128xf32>
    %160 = tpu.matmul %157, %159, %cst_63 {dimension_numbers = #tpu.dot_dimension_numbers<[1], [0], [0], [1], [0, 0, 1, 1], [], []>} : vector<8x128xbf16>, vector<128x128xbf16>, vector<8x128xf32> -> vector<8x128xf32>
    %c0_64 = arith.constant 0 : index
    %c0_65 = arith.constant 0 : index
    %c0_66 = arith.constant 0 : index
    %161 = vector.load %arg2[%c0_64, %c0_65, %c0_66] : memref<2x1x128xf32, #tpu.memory_space<vmem>>, vector<1x1x128xf32>
    %162 = vector.shape_cast %161 : vector<1x1x128xf32> to vector<1x128xf32>
    %163 = vector.broadcast %162 : vector<1x128xf32> to vector<8x128xf32>
    %164 = arith.addf %160, %163 : vector<8x128xf32>
    %165 = arith.truncf %164 : vector<8x128xf32> to vector<8x128xbf16>
    %c7 = arith.constant 7 : index
    %c0_67 = arith.constant 0 : index
    %c0_68 = arith.constant 0 : index
    %166 = vector.load %arg1[%c7, %c0_67, %c0_68] : memref<10x128x128xbf16, #tpu.memory_space<vmem>>, vector<1x128x128xbf16>
    %167 = vector.shape_cast %166 : vector<1x128x128xbf16> to vector<128x128xbf16>
    %cst_69 = arith.constant dense<0.000000e+00> : vector<8x128xf32>
    %168 = tpu.matmul %165, %167, %cst_69 {dimension_numbers = #tpu.dot_dimension_numbers<[1], [0], [0], [1], [0, 0, 1, 1], [], []>} : vector<8x128xbf16>, vector<128x128xbf16>, vector<8x128xf32> -> vector<8x128xf32>
    %cst_70 = arith.constant dense<0.000000e+00> : vector<128xf32>
    %169 = vector.multi_reduction <add>, %168, %cst_70 [0] : vector<8x128xf32> to vector<128xf32>
    %170 = vector.shape_cast %169 : vector<128xf32> to vector<1x128xf32>
    %cst_71 = arith.constant 1.250000e-01 : f32
    %171 = vector.broadcast %cst_71 : f32 to vector<1x128xf32>
    %172 = arith.mulf %170, %171 : vector<1x128xf32>
    %173 = arith.mulf %168, %168 : vector<8x128xf32>
    %cst_72 = arith.constant dense<0.000000e+00> : vector<128xf32>
    %174 = vector.multi_reduction <add>, %173, %cst_72 [0] : vector<8x128xf32> to vector<128xf32>
    %175 = vector.shape_cast %174 : vector<128xf32> to vector<1x128xf32>
    %cst_73 = arith.constant 1.250000e-01 : f32
    %176 = vector.broadcast %cst_73 : f32 to vector<1x128xf32>
    %177 = arith.mulf %175, %176 : vector<1x128xf32>
    %178 = arith.mulf %172, %172 : vector<1x128xf32>
    %179 = arith.subf %177, %178 : vector<1x128xf32>
    %cst_74 = arith.constant 0.000000e+00 : f32
    %180 = vector.broadcast %cst_74 : f32 to vector<1x128xf32>
    %181 = arith.maximumf %179, %180 : vector<1x128xf32>
    %182 = vector.broadcast %172 : vector<1x128xf32> to vector<8x128xf32>
    %183 = arith.subf %168, %182 : vector<8x128xf32>
    %cst_75 = arith.constant 9.99999974E-6 : f32
    %184 = vector.broadcast %cst_75 : f32 to vector<1x128xf32>
    %185 = arith.addf %181, %184 : vector<1x128xf32>
    %186 = math.rsqrt %185 : vector<1x128xf32>
    %187 = vector.broadcast %186 : vector<1x128xf32> to vector<8x128xf32>
    %188 = arith.mulf %183, %187 : vector<8x128xf32>
    %cst_76 = arith.constant 0.000000e+00 : f32
    %189 = vector.broadcast %cst_76 : f32 to vector<8x128xf32>
    %190 = arith.maximumf %188, %189 : vector<8x128xf32>
    %191 = arith.truncf %190 : vector<8x128xf32> to vector<8x128xbf16>
    %c8 = arith.constant 8 : index
    %c0_77 = arith.constant 0 : index
    %c0_78 = arith.constant 0 : index
    %192 = vector.load %arg1[%c8, %c0_77, %c0_78] : memref<10x128x128xbf16, #tpu.memory_space<vmem>>, vector<1x128x128xbf16>
    %193 = vector.shape_cast %192 : vector<1x128x128xbf16> to vector<128x128xbf16>
    %cst_79 = arith.constant dense<0.000000e+00> : vector<8x128xf32>
    %194 = tpu.matmul %191, %193, %cst_79 {dimension_numbers = #tpu.dot_dimension_numbers<[1], [0], [0], [1], [0, 0, 1, 1], [], []>} : vector<8x128xbf16>, vector<128x128xbf16>, vector<8x128xf32> -> vector<8x128xf32>
    %cst_80 = arith.constant dense<0.000000e+00> : vector<128xf32>
    %195 = vector.multi_reduction <add>, %194, %cst_80 [0] : vector<8x128xf32> to vector<128xf32>
    %196 = vector.shape_cast %195 : vector<128xf32> to vector<1x128xf32>
    %cst_81 = arith.constant 1.250000e-01 : f32
    %197 = vector.broadcast %cst_81 : f32 to vector<1x128xf32>
    %198 = arith.mulf %196, %197 : vector<1x128xf32>
    %199 = arith.mulf %194, %194 : vector<8x128xf32>
    %cst_82 = arith.constant dense<0.000000e+00> : vector<128xf32>
    %200 = vector.multi_reduction <add>, %199, %cst_82 [0] : vector<8x128xf32> to vector<128xf32>
    %201 = vector.shape_cast %200 : vector<128xf32> to vector<1x128xf32>
    %cst_83 = arith.constant 1.250000e-01 : f32
    %202 = vector.broadcast %cst_83 : f32 to vector<1x128xf32>
    %203 = arith.mulf %201, %202 : vector<1x128xf32>
    %204 = arith.mulf %198, %198 : vector<1x128xf32>
    %205 = arith.subf %203, %204 : vector<1x128xf32>
    %cst_84 = arith.constant 0.000000e+00 : f32
    %206 = vector.broadcast %cst_84 : f32 to vector<1x128xf32>
    %207 = arith.maximumf %205, %206 : vector<1x128xf32>
    %208 = vector.broadcast %198 : vector<1x128xf32> to vector<8x128xf32>
    %209 = arith.subf %194, %208 : vector<8x128xf32>
    %cst_85 = arith.constant 9.99999974E-6 : f32
    %210 = vector.broadcast %cst_85 : f32 to vector<1x128xf32>
    %211 = arith.addf %207, %210 : vector<1x128xf32>
    %212 = math.rsqrt %211 : vector<1x128xf32>
    %213 = vector.broadcast %212 : vector<1x128xf32> to vector<8x128xf32>
    %214 = arith.mulf %209, %213 : vector<8x128xf32>
    %cst_86 = arith.constant 0.000000e+00 : f32
    %215 = vector.broadcast %cst_86 : f32 to vector<8x128xf32>
    %216 = arith.maximumf %214, %215 : vector<8x128xf32>
    %217 = arith.truncf %216 : vector<8x128xf32> to vector<8x128xbf16>
    %c9 = arith.constant 9 : index
    %c0_87 = arith.constant 0 : index
    %c0_88 = arith.constant 0 : index
    %218 = vector.load %arg1[%c9, %c0_87, %c0_88] : memref<10x128x128xbf16, #tpu.memory_space<vmem>>, vector<1x128x128xbf16>
    %219 = vector.shape_cast %218 : vector<1x128x128xbf16> to vector<128x128xbf16>
    %cst_89 = arith.constant dense<0.000000e+00> : vector<8x128xf32>
    %220 = tpu.matmul %217, %219, %cst_89 {dimension_numbers = #tpu.dot_dimension_numbers<[1], [0], [0], [1], [0, 0, 1, 1], [], []>} : vector<8x128xbf16>, vector<128x128xbf16>, vector<8x128xf32> -> vector<8x128xf32>
    %c1_90 = arith.constant 1 : index
    %c0_91 = arith.constant 0 : index
    %c0_92 = arith.constant 0 : index
    %221 = vector.load %arg2[%c1_90, %c0_91, %c0_92] : memref<2x1x128xf32, #tpu.memory_space<vmem>>, vector<1x1x128xf32>
    %222 = vector.shape_cast %221 : vector<1x1x128xf32> to vector<1x128xf32>
    %223 = vector.broadcast %222 : vector<1x128xf32> to vector<8x128xf32>
    %224 = arith.addf %220, %223 : vector<8x128xf32>
    %c0_93 = arith.constant 0 : index
    %c0_94 = arith.constant 0 : index
    %225 = vector.load %arg3[%c0_93, %c0_94] : memref<8x128xf32, #tpu.memory_space<vmem>>, vector<8x128xf32>
    tpu.vector_store %arg3[%c0_93, %c0_94], %224 {strides = array<i32>} : memref<8x128xf32, #tpu.memory_space<vmem>>, vector<8x128xf32>,
    return
  }
}

</mosaic_0001>

<llo_original>
// kernel: forward.1
$region0: #{forward.1}
  #allocation0 [shape = 'u32[]', space=smem, size = 0x4, offset = 0x4, fixed_abs, tag = 'smem constant byte address 0x4 - core index']
  #allocation1 [shape = 'u32[144,128]{1,0:T(1,128)}', space=vmem, size = 0x12000, scoped, tag = 'internal scratch']
  %s0 = inlined_call_operand.vmem [shape: f32[8,128], index: 0, kind: input, shape index: {}]
  %s1 = inlined_call_operand.hbm [shape: bf16[10,128,128], index: 1, kind: input, shape index: {}]
  %s2 = inlined_call_operand.vmem [shape: f32[2,1,128], index: 2, kind: input, shape index: {}]
  %s3 = inlined_call_operand.vmem [shape: f32[8,128], index: 3, kind: output, shape index: {}]
  %s4 = sld [smem:[#allocation0]]
  $region26: #{forward.1} parent=0
    _
  %s6 = ssub.s32 1, %s4
  %s7 = scalar_select 0, %s6, %s4
  $region1: #{forward.1} parent=0
    #allocation2 [shape = 'u8[327680]{0}', space=vmem, size = 0x50000, scoped, tag = 'input window, operand 1, single buffered']
    #allocation3 [shape = 's32[1]{0}', space=sflag, size = 0x4, scoped, tag = 'scoped memory for forward.1']
    %8 = vsyncpa [#allocation3], 0
    // Predicated region
    $region2: #{forward.1} parent=1 // pred_check
      _
    $region3: #{forward.1} parent=1 // pred_check_branch
      %10 = sbr.rel (0) target = $region5
    $region4: #{forward.1} parent=1 // pred_region
      _
    $region5: #{forward.1} parent=1 // pred_fallthru
      _
    // Predicated region
    $region6: #{forward.1} parent=1 // pred_check
      _
    $region7: #{forward.1} parent=1 // pred_check_branch
      %12 = sbr.rel (0) target = $region9
    $region8: #{forward.1} parent=1 // pred_region
      %s14 = ssub.s32 10240, 10240
      %15 = vsyncadd [#allocation3], %s14
      %s16 = sshll.u32 [#allocation2], 4
      %s17 = int_to_ptr.vmem [resolvable:$true] %s16
      %22 = dma.hbm_to_vmem [thread:$0]  %s1, 10240, %s17, [#allocation3], 64, 64, 4
    $region9: #{forward.1} parent=1 // pred_fallthru
      _
    // Predicated region
    $region10: #{forward.1} parent=1 // pred_check
      _
    $region11: #{forward.1} parent=1 // pred_check_branch
      %24 = sbr.rel (0) target = $region13
    $region12: #{forward.1} parent=1 // pred_region
      _
    $region13: #{forward.1} parent=1 // pred_fallthru
      _
    // Predicated region
    $region14: #{forward.1} parent=1 // pred_check
      _
    $region15: #{forward.1} parent=1 // pred_check_branch
      %26 = sbr.rel (0) target = $region17
    $region16: #{forward.1} parent=1 // pred_region
      %27 = dma.done [#allocation3], 10240
    $region17: #{forward.1} parent=1 // pred_fallthru
      _
    %v29 = vld [vmem:[%s0] sm:$0xff]
    %v30 = vpack.c.bf16 %v29, %v29
    %v31 = vld [vmem:[#allocation2] sm:$0xf]
    %v32 = vld [vmem:[#allocation2 + $0x4] sm:$0xf]
    %v33 = vld [vmem:[#allocation2 + $0x8] sm:$0xf]
    %v34 = vld [vmem:[#allocation2 + $0xc] sm:$0xf]
    %v35 = vld [vmem:[#allocation2 + $0x10] sm:$0xf]
    %v36 = vld [vmem:[#allocation2 + $0x14] sm:$0xf]
    %v37 = vld [vmem:[#allocation2 + $0x18] sm:$0xf]
    %v38 = vld [vmem:[#allocation2 + $0x1c] sm:$0xf]
    %v39 = vld [vmem:[#allocation2 + $0x20] sm:$0xf]
    %v40 = vld [vmem:[#allocation2 + $0x24] sm:$0xf]
    %v41 = vld [vmem:[#allocation2 + $0x28] sm:$0xf]
    %v42 = vld [vmem:[#allocation2 + $0x2c] sm:$0xf]
    %v43 = vld [vmem:[#allocation2 + $0x30] sm:$0xf]
    %v44 = vld [vmem:[#allocation2 + $0x34] sm:$0xf]
    %v45 = vld [vmem:[#allocation2 + $0x38] sm:$0xf]
    %v46 = vld [vmem:[#allocation2 + $0x3c] sm:$0xf]
    %v63 = vunpack.c.l.b16 %v31
    %v64 = vunpack.c.l.b16 %v32
    %v65 = vunpack.c.l.b16 %v33
    %v66 = vunpack.c.l.b16 %v34
    %v67 = vunpack.c.l.b16 %v35
    %v68 = vunpack.c.l.b16 %v36
    %v69 = vunpack.c.l.b16 %v37
    %v70 = vunpack.c.l.b16 %v38
    %v71 = vunpack.c.l.b16 %v39
    %v72 = vunpack.c.l.b16 %v40
    %v73 = vunpack.c.l.b16 %v41
    %v74 = vunpack.c.l.b16 %v42
    %v75 = vunpack.c.l.b16 %v43
    %v76 = vunpack.c.l.b16 %v44
    %v77 = vunpack.c.l.b16 %v45
    %v78 = vunpack.c.l.b16 %v46
    %v79 = vpack.c.b16 %v64, %v63
    %v80 = vpack.c.b16 %v66, %v65
    %v81 = vpack.c.b16 %v68, %v67
    %v82 = vpack.c.b16 %v70, %v69
    %v83 = vpack.c.b16 %v72, %v71
    %v84 = vpack.c.b16 %v74, %v73
    %v85 = vpack.c.b16 %v76, %v75
    %v86 = vpack.c.b16 %v78, %v77
    %95 = vmatprep.subr.bf16.mxu0 0
    %96 = vmatpush1.bf16.msra.mxu0 %v86
    %97 = vmatprep.subr.bf16.mxu0 0
    %98 = vmatpush1.bf16.msra.mxu0 %v85
    %99 = vmatprep.subr.bf16.mxu0 0
    %100 = vmatpush1.bf16.msra.mxu0 %v84
    %101 = vmatprep.subr.bf16.mxu0 0
    %102 = vmatpush1.bf16.msra.mxu0 %v83
    %103 = vmatprep.subr.bf16.mxu0 0
    %104 = vmatpush1.bf16.msra.mxu0 %v82
    %105 = vmatprep.subr.bf16.mxu0 0
    %106 = vmatpush1.bf16.msra.mxu0 %v81
    %107 = vmatprep.subr.bf16.mxu0 0
    %108 = vmatpush1.bf16.msra.mxu0 %v80
    %109 = vmatprep.subr.bf16.mxu0 0
    %110 = vmatpush1.bf16.msra.mxu0 %v79
    %111 = vmatprep.subr.bf16.mxu0 0
    %112 = vmatpush2.bf16.msra.mxu0 0
    %113 = vmatprep.subr.bf16.mxu0 0
    %114 = vmatpush2.bf16.msra.mxu0 0
    %115 = vmatprep.subr.bf16.mxu0 0
    %116 = vmatpush2.bf16.msra.mxu0 0
    %117 = vmatprep.subr.bf16.mxu0 0
    %118 = vmatpush2.bf16.msra.mxu0 0
    %119 = vmatprep.subr.bf16.mxu0 0
    %120 = vmatpush2.bf16.msra.mxu0 0
    %121 = vmatprep.subr.bf16.mxu0 0
    %122 = vmatpush2.bf16.msra.mxu0 0
    %123 = vmatprep.subr.bf16.mxu0 0
    %124 = vmatpush2.bf16.msra.mxu0 0
    %125 = vmatprep.subr.bf16.mxu0 0
    %126 = vmatpush2.bf16.msra.mxu0 0
    %127 = vmatprep.mubr.bf16.mxu0 0
    %128 = vmatmul.mubr.bf16.gmra.mxu0 %v30
    %v129 = vpop.f32.mrf.mxu0
    %v130 = vadd.f32 0.0, %v129
    %v131 = vpop.f32.mrf.mxu0
    %v132 = vpop.f32.mrf.mxu0
    %v133 = vpop.f32.mrf.mxu0
    %134 = vdwg.mxu0
    %v135 = vrot.slane %v130, 4
    %v136 = vadd.f32 %v130, %v135
    %v137 = vrot.slane %v136, 2
    %v138 = vadd.f32 %v136, %v137
    %v139 = vrot.slane %v138, 1
    %v140 = vadd.f32 %v138, %v139
    %v141 = vmul.f32 %v140, 0.125
    %v142 = vmul.f32 %v130, %v130
    %v143 = vrot.slane %v142, 4
    %v144 = vadd.f32 %v142, %v143
    %v145 = vrot.slane %v144, 2
    %v146 = vadd.f32 %v144, %v145
    %v147 = vrot.slane %v146, 1
    %v148 = vadd.f32 %v146, %v147
    %v149 = vmul.f32 %v148, 0.125
    %v150 = vmul.f32 %v141, %v141
    %v151 = vsub.f32 %v149, %v150
    %v152 = vmax.f32 %v151, 0.0
    %v153 = vsub.f32 %v130, %v141
    %v154 = vadd.f32 %v152, 1e-05
    %v155 = vrsqrt.pop %v154
    %v156 = vmul.f32 %v153, %v155
    %v157 = vmax.f32 %v156, 0.0
    %v158 = vpack.c.bf16 %v157, %v157
    %s159 = scalar_lea.vmem [#allocation2], 64
    %v160 = vld [vmem:[%s159] sm:$0xf]
    %v161 = vld [vmem:[%s159 + $0x4] sm:$0xf]
    %v162 = vld [vmem:[%s159 + $0x8] sm:$0xf]
    %v163 = vld [vmem:[%s159 + $0xc] sm:$0xf]
    %v164 = vld [vmem:[%s159 + $0x10] sm:$0xf]
    %v165 = vld [vmem:[%s159 + $0x14] sm:$0xf]
    %v166 = vld [vmem:[%s159 + $0x18] sm:$0xf]
    %v167 = vld [vmem:[%s159 + $0x1c] sm:$0xf]
    %v168 = vld [vmem:[%s159 + $0x20] sm:$0xf]
    %v169 = vld [vmem:[%s159 + $0x24] sm:$0xf]
    %v170 = vld [vmem:[%s159 + $0x28] sm:$0xf]
    %v171 = vld [vmem:[%s159 + $0x2c] sm:$0xf]
    %v172 = vld [vmem:[%s159 + $0x30] sm:$0xf]
    %v173 = vld [vmem:[%s159 + $0x34] sm:$0xf]
    %v174 = vld [vmem:[%s159 + $0x38] sm:$0xf]
    %v175 = vld [vmem:[%s159 + $0x3c] sm:$0xf]
    %v192 = vunpack.c.l.b16 %v160
    %v193 = vunpack.c.l.b16 %v161
    %v194 = vunpack.c.l.b16 %v162
    %v195 = vunpack.c.l.b16 %v163
    %v196 = vunpack.c.l.b16 %v164
    %v197 = vunpack.c.l.b16 %v165
    %v198 = vunpack.c.l.b16 %v166
    %v199 = vunpack.c.l.b16 %v167
    %v200 = vunpack.c.l.b16 %v168
    %v201 = vunpack.c.l.b16 %v169
    %v202 = vunpack.c.l.b16 %v170
    %v203 = vunpack.c.l.b16 %v171
    %v204 = vunpack.c.l.b16 %v172
    %v205 = vunpack.c.l.b16 %v173
    %v206 = vunpack.c.l.b16 %v174
    %v207 = vunpack.c.l.b16 %v175
    %v208 = vpack.c.b16 %v193, %v192
    %v209 = vpack.c.b16 %v195, %v194
    %v210 = vpack.c.b16 %v197, %v196
    %v211 = vpack.c.b16 %v199, %v198
    %v212 = vpack.c.b16 %v201, %v200
    %v213 = vpack.c.b16 %v203, %v202
    %v214 = vpack.c.b16 %v205, %v204
    %v215 = vpack.c.b16 %v207, %v206
    %224 = vmatprep.subr.bf16.mxu0 0
    %225 = vmatpush1.bf16.msra.mxu0 %v215
    %226 = vmatprep.subr.bf16.mxu0 0
    %227 = vmatpush1.bf16.msra.mxu0 %v214
    %228 = vmatprep.subr.bf16.mxu0 0
    %229 = vmatpush1.bf16.msra.mxu0 %v213
    %230 = vmatprep.subr.bf16.mxu0 0
    %231 = vmatpush1.bf16.msra.mxu0 %v212
    %232 = vmatprep.subr.bf16.mxu0 0
    %233 = vmatpush1.bf16.msra.mxu0 %v211
    %234 = vmatprep.subr.bf16.mxu0 0
    %235 = vmatpush1.bf16.msra.mxu0 %v210
    %236 = vmatprep.subr.bf16.mxu0 0
    %237 = vmatpush1.bf16.msra.mxu0 %v209
    %238 = vmatprep.subr.bf16.mxu0 0
    %239 = vmatpush1.bf16.msra.mxu0 %v208
    %240 = vmatprep.subr.bf16.mxu0 0
    %241 = vmatpush2.bf16.msra.mxu0 0
    %242 = vmatprep.subr.bf16.mxu0 0
    %243 = vmatpush2.bf16.msra.mxu0 0
    %244 = vmatprep.subr.bf16.mxu0 0
    %245 = vmatpush2.bf16.msra.mxu0 0
    %246 = vmatprep.subr.bf16.mxu0 0
    %247 = vmatpush2.bf16.msra.mxu0 0
    %248 = vmatprep.subr.bf16.mxu0 0
    %249 = vmatpush2.bf16.msra.mxu0 0
    %250 = vmatprep.subr.bf16.mxu0 0
    %251 = vmatpush2.bf16.msra.mxu0 0
    %252 = vmatprep.subr.bf16.mxu0 0
    %253 = vmatpush2.bf16.msra.mxu0 0
    %254 = vmatprep.subr.bf16.mxu0 0
    %255 = vmatpush2.bf16.msra.mxu0 0
    %256 = vmatprep.mubr.bf16.mxu0 0
    %257 = vmatmul.mubr.bf16.gmra.mxu0 %v158
    %v258 = vpop.f32.mrf.mxu0
    %v259 = vadd.f32 0.0, %v258
    %v260 = vpop.f32.mrf.mxu0
    %v261 = vpop.f32.mrf.mxu0
    %v262 = vpop.f32.mrf.mxu0
    %263 = vdwg.mxu0
    %v264 = vrot.slane %v259, 4
    %v265 = vadd.f32 %v259, %v264
    %v266 = vrot.slane %v265, 2
    %v267 = vadd.f32 %v265, %v266
    %v268 = vrot.slane %v267, 1
    %v269 = vadd.f32 %v267, %v268
    %v270 = vmul.f32 %v269, 0.125
    %v271 = vmul.f32 %v259, %v259
    %v272 = vrot.slane %v271, 4
    %v273 = vadd.f32 %v271, %v272
    %v274 = vrot.slane %v273, 2
    %v275 = vadd.f32 %v273, %v274
    %v276 = vrot.slane %v275, 1
    %v277 = vadd.f32 %v275, %v276
    %v278 = vmul.f32 %v277, 0.125
    %v279 = vmul.f32 %v270, %v270
    %v280 = vsub.f32 %v278, %v279
    %v281 = vmax.f32 %v280, 0.0
    %v282 = vsub.f32 %v259, %v270
    %v283 = vadd.f32 %v281, 1e-05
    %v284 = vrsqrt.pop %v283
    %v285 = vmul.f32 %v282, %v284
    %v286 = vmax.f32 %v285, 0.0
    %v287 = vpack.c.bf16 %v286, %v286
    %s288 = scalar_lea.vmem [#allocation2], 128
    %v289 = vld [vmem:[%s288] sm:$0xf]
    %v290 = vld [vmem:[%s288 + $0x4] sm:$0xf]
    %v291 = vld [vmem:[%s288 + $0x8] sm:$0xf]
    %v292 = vld [vmem:[%s288 + $0xc] sm:$0xf]
    %v293 = vld [vmem:[%s288 + $0x10] sm:$0xf]
    %v294 = vld [vmem:[%s288 + $0x14] sm:$0xf]
    %v295 = vld [vmem:[%s288 + $0x18] sm:$0xf]
    %v296 = vld [vmem:[%s288 + $0x1c] sm:$0xf]
    %v297 = vld [vmem:[%s288 + $0x20] sm:$0xf]
    %v298 = vld [vmem:[%s288 + $0x24] sm:$0xf]
    %v299 = vld [vmem:[%s288 + $0x28] sm:$0xf]
    %v300 = vld [vmem:[%s288 + $0x2c] sm:$0xf]
    %v301 = vld [vmem:[%s288 + $0x30] sm:$0xf]
    %v302 = vld [vmem:[%s288 + $0x34] sm:$0xf]
    %v303 = vld [vmem:[%s288 + $0x38] sm:$0xf]
    %v304 = vld [vmem:[%s288 + $0x3c] sm:$0xf]
    %v321 = vunpack.c.l.b16 %v289
    %v322 = vunpack.c.l.b16 %v290
    %v323 = vunpack.c.l.b16 %v291
    %v324 = vunpack.c.l.b16 %v292
    %v325 = vunpack.c.l.b16 %v293
    %v326 = vunpack.c.l.b16 %v294
    %v327 = vunpack.c.l.b16 %v295
    %v328 = vunpack.c.l.b16 %v296
    %v329 = vunpack.c.l.b16 %v297
    %v330 = vunpack.c.l.b16 %v298
    %v331 = vunpack.c.l.b16 %v299
    %v332 = vunpack.c.l.b16 %v300
    %v333 = vunpack.c.l.b16 %v301
    %v334 = vunpack.c.l.b16 %v302
    %v335 = vunpack.c.l.b16 %v303
    %v336 = vunpack.c.l.b16 %v304
    %v337 = vpack.c.b16 %v322, %v321
    %v338 = vpack.c.b16 %v324, %v323
    %v339 = vpack.c.b16 %v326, %v325
    %v340 = vpack.c.b16 %v328, %v327
    %v341 = vpack.c.b16 %v330, %v329
    %v342 = vpack.c.b16 %v332, %v331
    %v343 = vpack.c.b16 %v334, %v333
    %v344 = vpack.c.b16 %v336, %v335
    %353 = vmatprep.subr.bf16.mxu0 0
    %354 = vmatpush1.bf16.msra.mxu0 %v344
    %355 = vmatprep.subr.bf16.mxu0 0
    %356 = vmatpush1.bf16.msra.mxu0 %v343
    %357 = vmatprep.subr.bf16.mxu0 0
    %358 = vmatpush1.bf16.msra.mxu0 %v342
    %359 = vmatprep.subr.bf16.mxu0 0
    %360 = vmatpush1.bf16.msra.mxu0 %v341
    %361 = vmatprep.subr.bf16.mxu0 0
    %362 = vmatpush1.bf16.msra.mxu0 %v340
    %363 = vmatprep.subr.bf16.mxu0 0
    %364 = vmatpush1.bf16.msra.mxu0 %v339
    %365 = vmatprep.subr.bf16.mxu0 0
    %366 = vmatpush1.bf16.msra.mxu0 %v338
    %367 = vmatprep.subr.bf16.mxu0 0
    %368 = vmatpush1.bf16.msra.mxu0 %v337
    %369 = vmatprep.subr.bf16.mxu0 0
    %370 = vmatpush2.bf16.msra.mxu0 0
    %371 = vmatprep.subr.bf16.mxu0 0
    %372 = vmatpush2.bf16.msra.mxu0 0
    %373 = vmatprep.subr.bf16.mxu0 0
    %374 = vmatpush2.bf16.msra.mxu0 0
    %375 = vmatprep.subr.bf16.mxu0 0
    %376 = vmatpush2.bf16.msra.mxu0 0
    %377 = vmatprep.subr.bf16.mxu0 0
    %378 = vmatpush2.bf16.msra.mxu0 0
    %379 = vmatprep.subr.bf16.mxu0 0
    %380 = vmatpush2.bf16.msra.mxu0 0
    %381 = vmatprep.subr.bf16.mxu0 0
    %382 = vmatpush2.bf16.msra.mxu0 0
    %383 = vmatprep.subr.bf16.mxu0 0
    %384 = vmatpush2.bf16.msra.mxu0 0
    %385 = vmatprep.mubr.bf16.mxu0 0
    %386 = vmatmul.mubr.bf16.gmra.mxu0 %v287
    %v387 = vpop.f32.mrf.mxu0
    %v388 = vadd.f32 0.0, %v387
    %v389 = vpop.f32.mrf.mxu0
    %v390 = vpop.f32.mrf.mxu0
    %v391 = vpop.f32.mrf.mxu0
    %392 = vdwg.mxu0
    %v393 = vrot.slane %v388, 4
    %v394 = vadd.f32 %v388, %v393
    %v395 = vrot.slane %v394, 2
    %v396 = vadd.f32 %v394, %v395
    %v397 = vrot.slane %v396, 1
    %v398 = vadd.f32 %v396, %v397
    %v399 = vmul.f32 %v398, 0.125
    %v400 = vmul.f32 %v388, %v388
    %v401 = vrot.slane %v400, 4
    %v402 = vadd.f32 %v400, %v401
    %v403 = vrot.slane %v402, 2
    %v404 = vadd.f32 %v402, %v403
    %v405 = vrot.slane %v404, 1
    %v406 = vadd.f32 %v404, %v405
    %v407 = vmul.f32 %v406, 0.125
    %v408 = vmul.f32 %v399, %v399
    %v409 = vsub.f32 %v407, %v408
    %v410 = vmax.f32 %v409, 0.0
    %v411 = vsub.f32 %v388, %v399
    %v412 = vadd.f32 %v410, 1e-05
    %v413 = vrsqrt.pop %v412
    %v414 = vmul.f32 %v411, %v413
    %v415 = vmax.f32 %v414, 0.0
    %v416 = vpack.c.bf16 %v415, %v415
    %s417 = scalar_lea.vmem [#allocation2], 192
    %v418 = vld [vmem:[%s417] sm:$0xf]
    %v419 = vld [vmem:[%s417 + $0x4] sm:$0xf]
    %v420 = vld [vmem:[%s417 + $0x8] sm:$0xf]
    %v421 = vld [vmem:[%s417 + $0xc] sm:$0xf]
    %v422 = vld [vmem:[%s417 + $0x10] sm:$0xf]
    %v423 = vld [vmem:[%s417 + $0x14] sm:$0xf]
    %v424 = vld [vmem:[%s417 + $0x18] sm:$0xf]
    %v425 = vld [vmem:[%s417 + $0x1c] sm:$0xf]
    %v426 = vld [vmem:[%s417 + $0x20] sm:$0xf]
    %v427 = vld [vmem:[%s417 + $0x24] sm:$0xf]
    %v428 = vld [vmem:[%s417 + $0x28] sm:$0xf]
    %v429 = vld [vmem:[%s417 + $0x2c] sm:$0xf]
    %v430 = vld [vmem:[%s417 + $0x30] sm:$0xf]
    %v431 = vld [vmem:[%s417 + $0x34] sm:$0xf]
    %v432 = vld [vmem:[%s417 + $0x38] sm:$0xf]
    %v433 = vld [vmem:[%s417 + $0x3c] sm:$0xf]
    %v450 = vunpack.c.l.b16 %v418
    %v451 = vunpack.c.l.b16 %v419
    %v452 = vunpack.c.l.b16 %v420
    %v453 = vunpack.c.l.b16 %v421
    %v454 = vunpack.c.l.b16 %v422
    %v455 = vunpack.c.l.b16 %v423
    %v456 = vunpack.c.l.b16 %v424
    %v457 = vunpack.c.l.b16 %v425
    %v458 = vunpack.c.l.b16 %v426
    %v459 = vunpack.c.l.b16 %v427
    %v460 = vunpack.c.l.b16 %v428
    %v461 = vunpack.c.l.b16 %v429
    %v462 = vunpack.c.l.b16 %v430
    %v463 = vunpack.c.l.b16 %v431
    %v464 = vunpack.c.l.b16 %v432
    %v465 = vunpack.c.l.b16 %v433
    %v466 = vpack.c.b16 %v451, %v450
    %v467 = vpack.c.b16 %v453, %v452
    %v468 = vpack.c.b16 %v455, %v454
    %v469 = vpack.c.b16 %v457, %v456
    %v470 = vpack.c.b16 %v459, %v458
    %v471 = vpack.c.b16 %v461, %v460
    %v472 = vpack.c.b16 %v463, %v462
    %v473 = vpack.c.b16 %v465, %v464
    %482 = vmatprep.subr.bf16.mxu0 0
    %483 = vmatpush1.bf16.msra.mxu0 %v473
    %484 = vmatprep.subr.bf16.mxu0 0
    %485 = vmatpush1.bf16.msra.mxu0 %v472
    %486 = vmatprep.subr.bf16.mxu0 0
    %487 = vmatpush1.bf16.msra.mxu0 %v471
    %488 = vmatprep.subr.bf16.mxu0 0
    %489 = vmatpush1.bf16.msra.mxu0 %v470
    %490 = vmatprep.subr.bf16.mxu0 0
    %491 = vmatpush1.bf16.msra.mxu0 %v469
    %492 = vmatprep.subr.bf16.mxu0 0
    %493 = vmatpush1.bf16.msra.mxu0 %v468
    %494 = vmatprep.subr.bf16.mxu0 0
    %495 = vmatpush1.bf16.msra.mxu0 %v467
    %496 = vmatprep.subr.bf16.mxu0 0
    %497 = vmatpush1.bf16.msra.mxu0 %v466
    %498 = vmatprep.subr.bf16.mxu0 0
    %499 = vmatpush2.bf16.msra.mxu0 0
    %500 = vmatprep.subr.bf16.mxu0 0
    %501 = vmatpush2.bf16.msra.mxu0 0
    %502 = vmatprep.subr.bf16.mxu0 0
    %503 = vmatpush2.bf16.msra.mxu0 0
    %504 = vmatprep.subr.bf16.mxu0 0
    %505 = vmatpush2.bf16.msra.mxu0 0
    %506 = vmatprep.subr.bf16.mxu0 0
    %507 = vmatpush2.bf16.msra.mxu0 0
    %508 = vmatprep.subr.bf16.mxu0 0
    %509 = vmatpush2.bf16.msra.mxu0 0
    %510 = vmatprep.subr.bf16.mxu0 0
    %511 = vmatpush2.bf16.msra.mxu0 0
    %512 = vmatprep.subr.bf16.mxu0 0
    %513 = vmatpush2.bf16.msra.mxu0 0
    %514 = vmatprep.mubr.bf16.mxu0 0
    %515 = vmatmul.mubr.bf16.gmra.mxu0 %v416
    %v516 = vpop.f32.mrf.mxu0
    %v517 = vadd.f32 0.0, %v516
    %v518 = vpop.f32.mrf.mxu0
    %v519 = vpop.f32.mrf.mxu0
    %v520 = vpop.f32.mrf.mxu0
    %521 = vdwg.mxu0
    %v522 = vrot.slane %v517, 4
    %v523 = vadd.f32 %v517, %v522
    %v524 = vrot.slane %v523, 2
    %v525 = vadd.f32 %v523, %v524
    %v526 = vrot.slane %v525, 1
    %v527 = vadd.f32 %v525, %v526
    %v528 = vmul.f32 %v527, 0.125
    %v529 = vmul.f32 %v517, %v517
    %v530 = vrot.slane %v529, 4
    %v531 = vadd.f32 %v529, %v530
    %v532 = vrot.slane %v531, 2
    %v533 = vadd.f32 %v531, %v532
    %v534 = vrot.slane %v533, 1
    %v535 = vadd.f32 %v533, %v534
    %v536 = vmul.f32 %v535, 0.125
    %v537 = vmul.f32 %v528, %v528
    %v538 = vsub.f32 %v536, %v537
    %v539 = vmax.f32 %v538, 0.0
    %v540 = vsub.f32 %v517, %v528
    %v541 = vadd.f32 %v539, 1e-05
    %v542 = vrsqrt.pop %v541
    %v543 = vmul.f32 %v540, %v542
    %v544 = vmax.f32 %v543, 0.0
    %v545 = vpack.c.bf16 %v544, %v544
    %s546 = scalar_lea.vmem [#allocation2], 256
    %v547 = vld [vmem:[%s546] sm:$0xf]
    %v548 = vld [vmem:[%s546 + $0x4] sm:$0xf]
    %v549 = vld [vmem:[%s546 + $0x8] sm:$0xf]
    %v550 = vld [vmem:[%s546 + $0xc] sm:$0xf]
    %v551 = vld [vmem:[%s546 + $0x10] sm:$0xf]
    %v552 = vld [vmem:[%s546 + $0x14] sm:$0xf]
    %v553 = vld [vmem:[%s546 + $0x18] sm:$0xf]
    %v554 = vld [vmem:[%s546 + $0x1c] sm:$0xf]
    %v555 = vld [vmem:[%s546 + $0x20] sm:$0xf]
    %v556 = vld [vmem:[%s546 + $0x24] sm:$0xf]
    %v557 = vld [vmem:[%s546 + $0x28] sm:$0xf]
    %v558 = vld [vmem:[%s546 + $0x2c] sm:$0xf]
    %v559 = vld [vmem:[%s546 + $0x30] sm:$0xf]
    %v560 = vld [vmem:[%s546 + $0x34] sm:$0xf]
    %v561 = vld [vmem:[%s546 + $0x38] sm:$0xf]
    %v562 = vld [vmem:[%s546 + $0x3c] sm:$0xf]
    %v579 = vunpack.c.l.b16 %v547
    %v580 = vunpack.c.l.b16 %v548
    %v581 = vunpack.c.l.b16 %v549
    %v582 = vunpack.c.l.b16 %v550
    %v583 = vunpack.c.l.b16 %v551
    %v584 = vunpack.c.l.b16 %v552
    %v585 = vunpack.c.l.b16 %v553
    %v586 = vunpack.c.l.b16 %v554
    %v587 = vunpack.c.l.b16 %v555
    %v588 = vunpack.c.l.b16 %v556
    %v589 = vunpack.c.l.b16 %v557
    %v590 = vunpack.c.l.b16 %v558
    %v591 = vunpack.c.l.b16 %v559
    %v592 = vunpack.c.l.b16 %v560
    %v593 = vunpack.c.l.b16 %v561
    %v594 = vunpack.c.l.b16 %v562
    %v595 = vpack.c.b16 %v580, %v579
    %v596 = vpack.c.b16 %v582, %v581
    %v597 = vpack.c.b16 %v584, %v583
    %v598 = vpack.c.b16 %v586, %v585
    %v599 = vpack.c.b16 %v588, %v587
    %v600 = vpack.c.b16 %v590, %v589
    %v601 = vpack.c.b16 %v592, %v591
    %v602 = vpack.c.b16 %v594, %v593
    %611 = vmatprep.subr.bf16.mxu0 0
    %612 = vmatpush1.bf16.msra.mxu0 %v602
    %613 = vmatprep.subr.bf16.mxu0 0
    %614 = vmatpush1.bf16.msra.mxu0 %v601
    %615 = vmatprep.subr.bf16.mxu0 0
    %616 = vmatpush1.bf16.msra.mxu0 %v600
    %617 = vmatprep.subr.bf16.mxu0 0
    %618 = vmatpush1.bf16.msra.mxu0 %v599
    %619 = vmatprep.subr.bf16.mxu0 0
    %620 = vmatpush1.bf16.msra.mxu0 %v598
    %621 = vmatprep.subr.bf16.mxu0 0
    %622 = vmatpush1.bf16.msra.mxu0 %v597
    %623 = vmatprep.subr.bf16.mxu0 0
    %624 = vmatpush1.bf16.msra.mxu0 %v596
    %625 = vmatprep.subr.bf16.mxu0 0
    %626 = vmatpush1.bf16.msra.mxu0 %v595
    %627 = vmatprep.subr.bf16.mxu0 0
    %628 = vmatpush2.bf16.msra.mxu0 0
    %629 = vmatprep.subr.bf16.mxu0 0
    %630 = vmatpush2.bf16.msra.mxu0 0
    %631 = vmatprep.subr.bf16.mxu0 0
    %632 = vmatpush2.bf16.msra.mxu0 0
    %633 = vmatprep.subr.bf16.mxu0 0
    %634 = vmatpush2.bf16.msra.mxu0 0
    %635 = vmatprep.subr.bf16.mxu0 0
    %636 = vmatpush2.bf16.msra.mxu0 0
    %637 = vmatprep.subr.bf16.mxu0 0
    %638 = vmatpush2.bf16.msra.mxu0 0
    %639 = vmatprep.subr.bf16.mxu0 0
    %640 = vmatpush2.bf16.msra.mxu0 0
    %641 = vmatprep.subr.bf16.mxu0 0
    %642 = vmatpush2.bf16.msra.mxu0 0
    %643 = vmatprep.mubr.bf16.mxu0 0
    %644 = vmatmul.mubr.bf16.gmra.mxu0 %v545
    %v645 = vpop.f32.mrf.mxu0
    %v646 = vadd.f32 0.0, %v645
    %v647 = vpop.f32.mrf.mxu0
    %v648 = vpop.f32.mrf.mxu0
    %v649 = vpop.f32.mrf.mxu0
    %650 = vdwg.mxu0
    %v651 = vrot.slane %v646, 4
    %v652 = vadd.f32 %v646, %v651
    %v653 = vrot.slane %v652, 2
    %v654 = vadd.f32 %v652, %v653
    %v655 = vrot.slane %v654, 1
    %v656 = vadd.f32 %v654, %v655
    %v657 = vmul.f32 %v656, 0.125
    %v658 = vmul.f32 %v646, %v646
    %v659 = vrot.slane %v658, 4
    %v660 = vadd.f32 %v658, %v659
    %v661 = vrot.slane %v660, 2
    %v662 = vadd.f32 %v660, %v661
    %v663 = vrot.slane %v662, 1
    %v664 = vadd.f32 %v662, %v663
    %v665 = vmul.f32 %v664, 0.125
    %v666 = vmul.f32 %v657, %v657
    %v667 = vsub.f32 %v665, %v666
    %v668 = vmax.f32 %v667, 0.0
    %v669 = vsub.f32 %v646, %v657
    %v670 = vadd.f32 %v668, 1e-05
    %v671 = vrsqrt.pop %v670
    %v672 = vmul.f32 %v669, %v671
    %v673 = vmax.f32 %v672, 0.0
    %v674 = vpack.c.bf16 %v673, %v673
    %s675 = scalar_lea.vmem [#allocation2], 320
    %v676 = vld [vmem:[%s675] sm:$0xf]
    %v677 = vld [vmem:[%s675 + $0x4] sm:$0xf]
    %v678 = vld [vmem:[%s675 + $0x8] sm:$0xf]
    %v679 = vld [vmem:[%s675 + $0xc] sm:$0xf]
    %v680 = vld [vmem:[%s675 + $0x10] sm:$0xf]
    %v681 = vld [vmem:[%s675 + $0x14] sm:$0xf]
    %v682 = vld [vmem:[%s675 + $0x18] sm:$0xf]
    %v683 = vld [vmem:[%s675 + $0x1c] sm:$0xf]
    %v684 = vld [vmem:[%s675 + $0x20] sm:$0xf]
    %v685 = vld [vmem:[%s675 + $0x24] sm:$0xf]
    %v686 = vld [vmem:[%s675 + $0x28] sm:$0xf]
    %v687 = vld [vmem:[%s675 + $0x2c] sm:$0xf]
    %v688 = vld [vmem:[%s675 + $0x30] sm:$0xf]
    %v689 = vld [vmem:[%s675 + $0x34] sm:$0xf]
    %v690 = vld [vmem:[%s675 + $0x38] sm:$0xf]
    %v691 = vld [vmem:[%s675 + $0x3c] sm:$0xf]
    %v708 = vunpack.c.l.b16 %v676
    %v709 = vunpack.c.l.b16 %v677
    %v710 = vunpack.c.l.b16 %v678
    %v711 = vunpack.c.l.b16 %v679
    %v712 = vunpack.c.l.b16 %v680
    %v713 = vunpack.c.l.b16 %v681
    %v714 = vunpack.c.l.b16 %v682
    %v715 = vunpack.c.l.b16 %v683
    %v716 = vunpack.c.l.b16 %v684
    %v717 = vunpack.c.l.b16 %v685
    %v718 = vunpack.c.l.b16 %v686
    %v719 = vunpack.c.l.b16 %v687
    %v720 = vunpack.c.l.b16 %v688
    %v721 = vunpack.c.l.b16 %v689
    %v722 = vunpack.c.l.b16 %v690
    %v723 = vunpack.c.l.b16 %v691
    %v724 = vpack.c.b16 %v709, %v708
    %v725 = vpack.c.b16 %v711, %v710
    %v726 = vpack.c.b16 %v713, %v712
    %v727 = vpack.c.b16 %v715, %v714
    %v728 = vpack.c.b16 %v717, %v716
    %v729 = vpack.c.b16 %v719, %v718
    %v730 = vpack.c.b16 %v721, %v720
    %v731 = vpack.c.b16 %v723, %v722
    %740 = vmatprep.subr.bf16.mxu0 0
    %741 = vmatpush1.bf16.msra.mxu0 %v731
    %742 = vmatprep.subr.bf16.mxu0 0
    %743 = vmatpush1.bf16.msra.mxu0 %v730
    %744 = vmatprep.subr.bf16.mxu0 0
    %745 = vmatpush1.bf16.msra.mxu0 %v729
    %746 = vmatprep.subr.bf16.mxu0 0
    %747 = vmatpush1.bf16.msra.mxu0 %v728
    %748 = vmatprep.subr.bf16.mxu0 0
    %749 = vmatpush1.bf16.msra.mxu0 %v727
    %750 = vmatprep.subr.bf16.mxu0 0
    %751 = vmatpush1.bf16.msra.mxu0 %v726
    %752 = vmatprep.subr.bf16.mxu0 0
    %753 = vmatpush1.bf16.msra.mxu0 %v725
    %754 = vmatprep.subr.bf16.mxu0 0
    %755 = vmatpush1.bf16.msra.mxu0 %v724
    %756 = vmatprep.subr.bf16.mxu0 0
    %757 = vmatpush2.bf16.msra.mxu0 0
    %758 = vmatprep.subr.bf16.mxu0 0
    %759 = vmatpush2.bf16.msra.mxu0 0
    %760 = vmatprep.subr.bf16.mxu0 0
    %761 = vmatpush2.bf16.msra.mxu0 0
    %762 = vmatprep.subr.bf16.mxu0 0
    %763 = vmatpush2.bf16.msra.mxu0 0
    %764 = vmatprep.subr.bf16.mxu0 0
    %765 = vmatpush2.bf16.msra.mxu0 0
    %766 = vmatprep.subr.bf16.mxu0 0
    %767 = vmatpush2.bf16.msra.mxu0 0
    %768 = vmatprep.subr.bf16.mxu0 0
    %769 = vmatpush2.bf16.msra.mxu0 0
    %770 = vmatprep.subr.bf16.mxu0 0
    %771 = vmatpush2.bf16.msra.mxu0 0
    %772 = vmatprep.mubr.bf16.mxu0 0
    %773 = vmatmul.mubr.bf16.gmra.mxu0 %v674
    %v774 = vpop.f32.mrf.mxu0
    %v775 = vadd.f32 0.0, %v774
    %v776 = vpop.f32.mrf.mxu0
    %v777 = vpop.f32.mrf.mxu0
    %v778 = vpop.f32.mrf.mxu0
    %779 = vdwg.mxu0
    %v780 = vrot.slane %v775, 4
    %v781 = vadd.f32 %v775, %v780
    %v782 = vrot.slane %v781, 2
    %v783 = vadd.f32 %v781, %v782
    %v784 = vrot.slane %v783, 1
    %v785 = vadd.f32 %v783, %v784
    %v786 = vmul.f32 %v785, 0.125
    %v787 = vmul.f32 %v775, %v775
    %v788 = vrot.slane %v787, 4
    %v789 = vadd.f32 %v787, %v788
    %v790 = vrot.slane %v789, 2
    %v791 = vadd.f32 %v789, %v790
    %v792 = vrot.slane %v791, 1
    %v793 = vadd.f32 %v791, %v792
    %v794 = vmul.f32 %v793, 0.125
    %v795 = vmul.f32 %v786, %v786
    %v796 = vsub.f32 %v794, %v795
    %v797 = vmax.f32 %v796, 0.0
    %v798 = vsub.f32 %v775, %v786
    %v799 = vadd.f32 %v797, 1e-05
    %v800 = vrsqrt.pop %v799
    %v801 = vmul.f32 %v798, %v800
    %v802 = vmax.f32 %v801, 0.0
    %v803 = vpack.c.bf16 %v802, %v802
    %s804 = scalar_lea.vmem [#allocation2], 384
    %v805 = vld [vmem:[%s804] sm:$0xf]
    %v806 = vld [vmem:[%s804 + $0x4] sm:$0xf]
    %v807 = vld [vmem:[%s804 + $0x8] sm:$0xf]
    %v808 = vld [vmem:[%s804 + $0xc] sm:$0xf]
    %v809 = vld [vmem:[%s804 + $0x10] sm:$0xf]
    %v810 = vld [vmem:[%s804 + $0x14] sm:$0xf]
    %v811 = vld [vmem:[%s804 + $0x18] sm:$0xf]
    %v812 = vld [vmem:[%s804 + $0x1c] sm:$0xf]
    %v813 = vld [vmem:[%s804 + $0x20] sm:$0xf]
    %v814 = vld [vmem:[%s804 + $0x24] sm:$0xf]
    %v815 = vld [vmem:[%s804 + $0x28] sm:$0xf]
    %v816 = vld [vmem:[%s804 + $0x2c] sm:$0xf]
    %v817 = vld [vmem:[%s804 + $0x30] sm:$0xf]
    %v818 = vld [vmem:[%s804 + $0x34] sm:$0xf]
    %v819 = vld [vmem:[%s804 + $0x38] sm:$0xf]
    %v820 = vld [vmem:[%s804 + $0x3c] sm:$0xf]
    %v821 = vld [vmem:[%s2] sm:$0x1]
    %v823 = vlaneseq
    %v824 = vshrl.u32 %v823, 7
    %v825 = vsub.s32 0, %v824
    %v826 = vrot.slane %v821, %v825
    %v844 = vunpack.c.l.b16 %v805
    %v845 = vunpack.c.l.b16 %v806
    %v846 = vunpack.c.l.b16 %v807
    %v847 = vunpack.c.l.b16 %v808
    %v848 = vunpack.c.l.b16 %v809
    %v849 = vunpack.c.l.b16 %v810
    %v850 = vunpack.c.l.b16 %v811
    %v851 = vunpack.c.l.b16 %v812
    %v852 = vunpack.c.l.b16 %v813
    %v853 = vunpack.c.l.b16 %v814
    %v854 = vunpack.c.l.b16 %v815
    %v855 = vunpack.c.l.b16 %v816
    %v856 = vunpack.c.l.b16 %v817
    %v857 = vunpack.c.l.b16 %v818
    %v858 = vunpack.c.l.b16 %v819
    %v859 = vunpack.c.l.b16 %v820
    %v860 = vpack.c.b16 %v845, %v844
    %v861 = vpack.c.b16 %v847, %v846
    %v862 = vpack.c.b16 %v849, %v848
    %v863 = vpack.c.b16 %v851, %v850
    %v864 = vpack.c.b16 %v853, %v852
    %v865 = vpack.c.b16 %v855, %v854
    %v866 = vpack.c.b16 %v857, %v856
    %v867 = vpack.c.b16 %v859, %v858
    %876 = vmatprep.subr.bf16.mxu0 0
    %877 = vmatpush1.bf16.msra.mxu0 %v867
    %878 = vmatprep.subr.bf16.mxu0 0
    %879 = vmatpush1.bf16.msra.mxu0 %v866
    %880 = vmatprep.subr.bf16.mxu0 0
    %881 = vmatpush1.bf16.msra.mxu0 %v865
    %882 = vmatprep.subr.bf16.mxu0 0
    %883 = vmatpush1.bf16.msra.mxu0 %v864
    %884 = vmatprep.subr.bf16.mxu0 0
    %885 = vmatpush1.bf16.msra.mxu0 %v863
    %886 = vmatprep.subr.bf16.mxu0 0
    %887 = vmatpush1.bf16.msra.mxu0 %v862
    %888 = vmatprep.subr.bf16.mxu0 0
    %889 = vmatpush1.bf16.msra.mxu0 %v861
    %890 = vmatprep.subr.bf16.mxu0 0
    %891 = vmatpush1.bf16.msra.mxu0 %v860
    %892 = vmatprep.subr.bf16.mxu0 0
    %893 = vmatpush2.bf16.msra.mxu0 0
    %894 = vmatprep.subr.bf16.mxu0 0
    %895 = vmatpush2.bf16.msra.mxu0 0
    %896 = vmatprep.subr.bf16.mxu0 0
    %897 = vmatpush2.bf16.msra.mxu0 0
    %898 = vmatprep.subr.bf16.mxu0 0
    %899 = vmatpush2.bf16.msra.mxu0 0
    %900 = vmatprep.subr.bf16.mxu0 0
    %901 = vmatpush2.bf16.msra.mxu0 0
    %902 = vmatprep.subr.bf16.mxu0 0
    %903 = vmatpush2.bf16.msra.mxu0 0
    %904 = vmatprep.subr.bf16.mxu0 0
    %905 = vmatpush2.bf16.msra.mxu0 0
    %906 = vmatprep.subr.bf16.mxu0 0
    %907 = vmatpush2.bf16.msra.mxu0 0
    %908 = vmatprep.mubr.bf16.mxu0 0
    %909 = vmatmul.mubr.bf16.gmra.mxu0 %v803
    %v910 = vpop.f32.mrf.mxu0
    %v911 = vadd.f32 %v826, %v910
    %v912 = vpop.f32.mrf.mxu0
    %v913 = vpop.f32.mrf.mxu0
    %v914 = vpop.f32.mrf.mxu0
    %915 = vdwg.mxu0
    %v916 = vpack.c.bf16 %v911, %v911
    %s917 = scalar_lea.vmem [#allocation2], 448
    %v918 = vld [vmem:[%s917] sm:$0xf]
    %v919 = vld [vmem:[%s917 + $0x4] sm:$0xf]
    %v920 = vld [vmem:[%s917 + $0x8] sm:$0xf]
    %v921 = vld [vmem:[%s917 + $0xc] sm:$0xf]
    %v922 = vld [vmem:[%s917 + $0x10] sm:$0xf]
    %v923 = vld [vmem:[%s917 + $0x14] sm:$0xf]
    %v924 = vld [vmem:[%s917 + $0x18] sm:$0xf]
    %v925 = vld [vmem:[%s917 + $0x1c] sm:$0xf]
    %v926 = vld [vmem:[%s917 + $0x20] sm:$0xf]
    %v927 = vld [vmem:[%s917 + $0x24] sm:$0xf]
    %v928 = vld [vmem:[%s917 + $0x28] sm:$0xf]
    %v929 = vld [vmem:[%s917 + $0x2c] sm:$0xf]
    %v930 = vld [vmem:[%s917 + $0x30] sm:$0xf]
    %v931 = vld [vmem:[%s917 + $0x34] sm:$0xf]
    %v932 = vld [vmem:[%s917 + $0x38] sm:$0xf]
    %v933 = vld [vmem:[%s917 + $0x3c] sm:$0xf]
    %v950 = vunpack.c.l.b16 %v918
    %v951 = vunpack.c.l.b16 %v919
    %v952 = vunpack.c.l.b16 %v920
    %v953 = vunpack.c.l.b16 %v921
    %v954 = vunpack.c.l.b16 %v922
    %v955 = vunpack.c.l.b16 %v923
    %v956 = vunpack.c.l.b16 %v924
    %v957 = vunpack.c.l.b16 %v925
    %v958 = vunpack.c.l.b16 %v926
    %v959 = vunpack.c.l.b16 %v927
    %v960 = vunpack.c.l.b16 %v928
    %v961 = vunpack.c.l.b16 %v929
    %v962 = vunpack.c.l.b16 %v930
    %v963 = vunpack.c.l.b16 %v931
    %v964 = vunpack.c.l.b16 %v932
    %v965 = vunpack.c.l.b16 %v933
    %v966 = vpack.c.b16 %v951, %v950
    %v967 = vpack.c.b16 %v953, %v952
    %v968 = vpack.c.b16 %v955, %v954
    %v969 = vpack.c.b16 %v957, %v956
    %v970 = vpack.c.b16 %v959, %v958
    %v971 = vpack.c.b16 %v961, %v960
    %v972 = vpack.c.b16 %v963, %v962
    %v973 = vpack.c.b16 %v965, %v964
    %982 = vmatprep.subr.bf16.mxu0 0
    %983 = vmatpush1.bf16.msra.mxu0 %v973
    %984 = vmatprep.subr.bf16.mxu0 0
    %985 = vmatpush1.bf16.msra.mxu0 %v972
    %986 = vmatprep.subr.bf16.mxu0 0
    %987 = vmatpush1.bf16.msra.mxu0 %v971
    %988 = vmatprep.subr.bf16.mxu0 0
    %989 = vmatpush1.bf16.msra.mxu0 %v970
    %990 = vmatprep.subr.bf16.mxu0 0
    %991 = vmatpush1.bf16.msra.mxu0 %v969
    %992 = vmatprep.subr.bf16.mxu0 0
    %993 = vmatpush1.bf16.msra.mxu0 %v968
    %994 = vmatprep.subr.bf16.mxu0 0
    %995 = vmatpush1.bf16.msra.mxu0 %v967
    %996 = vmatprep.subr.bf16.mxu0 0
    %997 = vmatpush1.bf16.msra.mxu0 %v966
    %998 = vmatprep.subr.bf16.mxu0 0
    %999 = vmatpush2.bf16.msra.mxu0 0
    %1000 = vmatprep.subr.bf16.mxu0 0
    %1001 = vmatpush2.bf16.msra.mxu0 0
    %1002 = vmatprep.subr.bf16.mxu0 0
    %1003 = vmatpush2.bf16.msra.mxu0 0
    %1004 = vmatprep.subr.bf16.mxu0 0
    %1005 = vmatpush2.bf16.msra.mxu0 0
    %1006 = vmatprep.subr.bf16.mxu0 0
    %1007 = vmatpush2.bf16.msra.mxu0 0
    %1008 = vmatprep.subr.bf16.mxu0 0
    %1009 = vmatpush2.bf16.msra.mxu0 0
    %1010 = vmatprep.subr.bf16.mxu0 0
    %1011 = vmatpush2.bf16.msra.mxu0 0
    %1012 = vmatprep.subr.bf16.mxu0 0
    %1013 = vmatpush2.bf16.msra.mxu0 0
    %1014 = vmatprep.mubr.bf16.mxu0 0
    %1015 = vmatmul.mubr.bf16.gmra.mxu0 %v916
    %v1016 = vpop.f32.mrf.mxu0
    %v1017 = vadd.f32 0.0, %v1016
    %v1018 = vpop.f32.mrf.mxu0
    %v1019 = vpop.f32.mrf.mxu0
    %v1020 = vpop.f32.mrf.mxu0
    %1021 = vdwg.mxu0
    %v1022 = vrot.slane %v1017, 4
    %v1023 = vadd.f32 %v1017, %v1022
    %v1024 = vrot.slane %v1023, 2
    %v1025 = vadd.f32 %v1023, %v1024
    %v1026 = vrot.slane %v1025, 1
    %v1027 = vadd.f32 %v1025, %v1026
    %v1028 = vmul.f32 %v1027, 0.125
    %v1029 = vmul.f32 %v1017, %v1017
    %v1030 = vrot.slane %v1029, 4
    %v1031 = vadd.f32 %v1029, %v1030
    %v1032 = vrot.slane %v1031, 2
    %v1033 = vadd.f32 %v1031, %v1032
    %v1034 = vrot.slane %v1033, 1
    %v1035 = vadd.f32 %v1033, %v1034
    %v1036 = vmul.f32 %v1035, 0.125
    %v1037 = vmul.f32 %v1028, %v1028
    %v1038 = vsub.f32 %v1036, %v1037
    %v1039 = vmax.f32 %v1038, 0.0
    %v1040 = vsub.f32 %v1017, %v1028
    %v1041 = vadd.f32 %v1039, 1e-05
    %v1042 = vrsqrt.pop %v1041
    %v1043 = vmul.f32 %v1040, %v1042
    %v1044 = vmax.f32 %v1043, 0.0
    %v1045 = vpack.c.bf16 %v1044, %v1044
    %s1046 = scalar_lea.vmem [#allocation2], 512
    %v1047 = vld [vmem:[%s1046] sm:$0xf]
    %v1048 = vld [vmem:[%s1046 + $0x4] sm:$0xf]
    %v1049 = vld [vmem:[%s1046 + $0x8] sm:$0xf]
    %v1050 = vld [vmem:[%s1046 + $0xc] sm:$0xf]
    %v1051 = vld [vmem:[%s1046 + $0x10] sm:$0xf]
    %v1052 = vld [vmem:[%s1046 + $0x14] sm:$0xf]
    %v1053 = vld [vmem:[%s1046 + $0x18] sm:$0xf]
    %v1054 = vld [vmem:[%s1046 + $0x1c] sm:$0xf]
    %v1055 = vld [vmem:[%s1046 + $0x20] sm:$0xf]
    %v1056 = vld [vmem:[%s1046 + $0x24] sm:$0xf]
    %v1057 = vld [vmem:[%s1046 + $0x28] sm:$0xf]
    %v1058 = vld [vmem:[%s1046 + $0x2c] sm:$0xf]
    %v1059 = vld [vmem:[%s1046 + $0x30] sm:$0xf]
    %v1060 = vld [vmem:[%s1046 + $0x34] sm:$0xf]
    %v1061 = vld [vmem:[%s1046 + $0x38] sm:$0xf]
    %v1062 = vld [vmem:[%s1046 + $0x3c] sm:$0xf]
    %v1079 = vunpack.c.l.b16 %v1047
    %v1080 = vunpack.c.l.b16 %v1048
    %v1081 = vunpack.c.l.b16 %v1049
    %v1082 = vunpack.c.l.b16 %v1050
    %v1083 = vunpack.c.l.b16 %v1051
    %v1084 = vunpack.c.l.b16 %v1052
    %v1085 = vunpack.c.l.b16 %v1053
    %v1086 = vunpack.c.l.b16 %v1054
    %v1087 = vunpack.c.l.b16 %v1055
    %v1088 = vunpack.c.l.b16 %v1056
    %v1089 = vunpack.c.l.b16 %v1057
    %v1090 = vunpack.c.l.b16 %v1058
    %v1091 = vunpack.c.l.b16 %v1059
    %v1092 = vunpack.c.l.b16 %v1060
    %v1093 = vunpack.c.l.b16 %v1061
    %v1094 = vunpack.c.l.b16 %v1062
    %v1095 = vpack.c.b16 %v1080, %v1079
    %v1096 = vpack.c.b16 %v1082, %v1081
    %v1097 = vpack.c.b16 %v1084, %v1083
    %v1098 = vpack.c.b16 %v1086, %v1085
    %v1099 = vpack.c.b16 %v1088, %v1087
    %v1100 = vpack.c.b16 %v1090, %v1089
    %v1101 = vpack.c.b16 %v1092, %v1091
    %v1102 = vpack.c.b16 %v1094, %v1093
    %1111 = vmatprep.subr.bf16.mxu0 0
    %1112 = vmatpush1.bf16.msra.mxu0 %v1102
    %1113 = vmatprep.subr.bf16.mxu0 0
    %1114 = vmatpush1.bf16.msra.mxu0 %v1101
    %1115 = vmatprep.subr.bf16.mxu0 0
    %1116 = vmatpush1.bf16.msra.mxu0 %v1100
    %1117 = vmatprep.subr.bf16.mxu0 0
    %1118 = vmatpush1.bf16.msra.mxu0 %v1099
    %1119 = vmatprep.subr.bf16.mxu0 0
    %1120 = vmatpush1.bf16.msra.mxu0 %v1098
    %1121 = vmatprep.subr.bf16.mxu0 0
    %1122 = vmatpush1.bf16.msra.mxu0 %v1097
    %1123 = vmatprep.subr.bf16.mxu0 0
    %1124 = vmatpush1.bf16.msra.mxu0 %v1096
    %1125 = vmatprep.subr.bf16.mxu0 0
    %1126 = vmatpush1.bf16.msra.mxu0 %v1095
    %1127 = vmatprep.subr.bf16.mxu0 0
    %1128 = vmatpush2.bf16.msra.mxu0 0
    %1129 = vmatprep.subr.bf16.mxu0 0
    %1130 = vmatpush2.bf16.msra.mxu0 0
    %1131 = vmatprep.subr.bf16.mxu0 0
    %1132 = vmatpush2.bf16.msra.mxu0 0
    %1133 = vmatprep.subr.bf16.mxu0 0
    %1134 = vmatpush2.bf16.msra.mxu0 0
    %1135 = vmatprep.subr.bf16.mxu0 0
    %1136 = vmatpush2.bf16.msra.mxu0 0
    %1137 = vmatprep.subr.bf16.mxu0 0
    %1138 = vmatpush2.bf16.msra.mxu0 0
    %1139 = vmatprep.subr.bf16.mxu0 0
    %1140 = vmatpush2.bf16.msra.mxu0 0
    %1141 = vmatprep.subr.bf16.mxu0 0
    %1142 = vmatpush2.bf16.msra.mxu0 0
    %1143 = vmatprep.mubr.bf16.mxu0 0
    %1144 = vmatmul.mubr.bf16.gmra.mxu0 %v1045
    %v1145 = vpop.f32.mrf.mxu0
    %v1146 = vadd.f32 0.0, %v1145
    %v1147 = vpop.f32.mrf.mxu0
    %v1148 = vpop.f32.mrf.mxu0
    %v1149 = vpop.f32.mrf.mxu0
    %1150 = vdwg.mxu0
    %v1151 = vrot.slane %v1146, 4
    %v1152 = vadd.f32 %v1146, %v1151
    %v1153 = vrot.slane %v1152, 2
    %v1154 = vadd.f32 %v1152, %v1153
    %v1155 = vrot.slane %v1154, 1
    %v1156 = vadd.f32 %v1154, %v1155
    %v1157 = vmul.f32 %v1156, 0.125
    %v1158 = vmul.f32 %v1146, %v1146
    %v1159 = vrot.slane %v1158, 4
    %v1160 = vadd.f32 %v1158, %v1159
    %v1161 = vrot.slane %v1160, 2
    %v1162 = vadd.f32 %v1160, %v1161
    %v1163 = vrot.slane %v1162, 1
    %v1164 = vadd.f32 %v1162, %v1163
    %v1165 = vmul.f32 %v1164, 0.125
    %v1166 = vmul.f32 %v1157, %v1157
    %v1167 = vsub.f32 %v1165, %v1166
    %v1168 = vmax.f32 %v1167, 0.0
    %v1169 = vsub.f32 %v1146, %v1157
    %v1170 = vadd.f32 %v1168, 1e-05
    %v1171 = vrsqrt.pop %v1170
    %v1172 = vmul.f32 %v1169, %v1171
    %v1173 = vmax.f32 %v1172, 0.0
    %v1174 = vpack.c.bf16 %v1173, %v1173
    %s1175 = scalar_lea.vmem [#allocation2], 576
    %v1176 = vld [vmem:[%s1175] sm:$0xf]
    %v1177 = vld [vmem:[%s1175 + $0x4] sm:$0xf]
    %v1178 = vld [vmem:[%s1175 + $0x8] sm:$0xf]
    %v1179 = vld [vmem:[%s1175 + $0xc] sm:$0xf]
    %v1180 = vld [vmem:[%s1175 + $0x10] sm:$0xf]
    %v1181 = vld [vmem:[%s1175 + $0x14] sm:$0xf]
    %v1182 = vld [vmem:[%s1175 + $0x18] sm:$0xf]
    %v1183 = vld [vmem:[%s1175 + $0x1c] sm:$0xf]
    %v1184 = vld [vmem:[%s1175 + $0x20] sm:$0xf]
    %v1185 = vld [vmem:[%s1175 + $0x24] sm:$0xf]
    %v1186 = vld [vmem:[%s1175 + $0x28] sm:$0xf]
    %v1187 = vld [vmem:[%s1175 + $0x2c] sm:$0xf]
    %v1188 = vld [vmem:[%s1175 + $0x30] sm:$0xf]
    %v1189 = vld [vmem:[%s1175 + $0x34] sm:$0xf]
    %v1190 = vld [vmem:[%s1175 + $0x38] sm:$0xf]
    %v1191 = vld [vmem:[%s1175 + $0x3c] sm:$0xf]
    %s1192 = scalar_lea.vmem %s2, 1
    %v1193 = vld [vmem:[%s1192] sm:$0x1]
    %v1195 = vlaneseq
    %v1196 = vshrl.u32 %v1195, 7
    %v1197 = vsub.s32 0, %v1196
    %v1198 = vrot.slane %v1193, %v1197
    %v1216 = vunpack.c.l.b16 %v1176
    %v1217 = vunpack.c.l.b16 %v1177
    %v1218 = vunpack.c.l.b16 %v1178
    %v1219 = vunpack.c.l.b16 %v1179
    %v1220 = vunpack.c.l.b16 %v1180
    %v1221 = vunpack.c.l.b16 %v1181
    %v1222 = vunpack.c.l.b16 %v1182
    %v1223 = vunpack.c.l.b16 %v1183
    %v1224 = vunpack.c.l.b16 %v1184
    %v1225 = vunpack.c.l.b16 %v1185
    %v1226 = vunpack.c.l.b16 %v1186
    %v1227 = vunpack.c.l.b16 %v1187
    %v1228 = vunpack.c.l.b16 %v1188
    %v1229 = vunpack.c.l.b16 %v1189
    %v1230 = vunpack.c.l.b16 %v1190
    %v1231 = vunpack.c.l.b16 %v1191
    %v1232 = vpack.c.b16 %v1217, %v1216
    %v1233 = vpack.c.b16 %v1219, %v1218
    %v1234 = vpack.c.b16 %v1221, %v1220
    %v1235 = vpack.c.b16 %v1223, %v1222
    %v1236 = vpack.c.b16 %v1225, %v1224
    %v1237 = vpack.c.b16 %v1227, %v1226
    %v1238 = vpack.c.b16 %v1229, %v1228
    %v1239 = vpack.c.b16 %v1231, %v1230
    %1248 = vmatprep.subr.bf16.mxu0 0
    %1249 = vmatpush1.bf16.msra.mxu0 %v1239
    %1250 = vmatprep.subr.bf16.mxu0 0
    %1251 = vmatpush1.bf16.msra.mxu0 %v1238
    %1252 = vmatprep.subr.bf16.mxu0 0
    %1253 = vmatpush1.bf16.msra.mxu0 %v1237
    %1254 = vmatprep.subr.bf16.mxu0 0
    %1255 = vmatpush1.bf16.msra.mxu0 %v1236
    %1256 = vmatprep.subr.bf16.mxu0 0
    %1257 = vmatpush1.bf16.msra.mxu0 %v1235
    %1258 = vmatprep.subr.bf16.mxu0 0
    %1259 = vmatpush1.bf16.msra.mxu0 %v1234
    %1260 = vmatprep.subr.bf16.mxu0 0
    %1261 = vmatpush1.bf16.msra.mxu0 %v1233
    %1262 = vmatprep.subr.bf16.mxu0 0
    %1263 = vmatpush1.bf16.msra.mxu0 %v1232
    %1264 = vmatprep.subr.bf16.mxu0 0
    %1265 = vmatpush2.bf16.msra.mxu0 0
    %1266 = vmatprep.subr.bf16.mxu0 0
    %1267 = vmatpush2.bf16.msra.mxu0 0
    %1268 = vmatprep.subr.bf16.mxu0 0
    %1269 = vmatpush2.bf16.msra.mxu0 0
    %1270 = vmatprep.subr.bf16.mxu0 0
    %1271 = vmatpush2.bf16.msra.mxu0 0
    %1272 = vmatprep.subr.bf16.mxu0 0
    %1273 = vmatpush2.bf16.msra.mxu0 0
    %1274 = vmatprep.subr.bf16.mxu0 0
    %1275 = vmatpush2.bf16.msra.mxu0 0
    %1276 = vmatprep.subr.bf16.mxu0 0
    %1277 = vmatpush2.bf16.msra.mxu0 0
    %1278 = vmatprep.subr.bf16.mxu0 0
    %1279 = vmatpush2.bf16.msra.mxu0 0
    %1280 = vmatprep.mubr.bf16.mxu0 0
    %1281 = vmatmul.mubr.bf16.gmra.mxu0 %v1174
    %v1282 = vpop.f32.mrf.mxu0
    %v1283 = vadd.f32 %v1198, %v1282
    %v1284 = vpop.f32.mrf.mxu0
    %v1285 = vpop.f32.mrf.mxu0
    %v1286 = vpop.f32.mrf.mxu0
    %1287 = vdwg.mxu0
    %1288 = vst [vmem:[%s3] sm:$0xff] %v1283
    // Predicated region
    $region18: #{forward.1} parent=1 // pred_check
      _
    $region19: #{forward.1} parent=1 // pred_check_branch
      %1290 = sbr.rel (0) target = $region21
    $region20: #{forward.1} parent=1 // pred_region
      _
    $region21: #{forward.1} parent=1 // pred_fallthru
      _
    // Predicated region
    $region22: #{forward.1} parent=1 // pred_check
      _
    $region23: #{forward.1} parent=1 // pred_check_branch
      %1292 = sbr.rel (0) target = $region25
    $region24: #{forward.1} parent=1 // pred_region
      _
    $region25: #{forward.1} parent=1 // pred_fallthru
      _
    %1293 = vsyncpa [#allocation3], 1

</llo_original>
